<compile_context>
chip_gen: v5e
topology: v5e:2x2
jax: 0.10.0
libtpu: 0.0.40
codegen_flags: <defaults>
</compile_context>

<pallas_src>
import math
import functools

import jax
import jax.numpy as jnp
from jax import lax
from jax.experimental import pallas as pl
from jax.experimental.pallas import tpu as pltpu


def _mha_kernel(x_ref, wq_ref, bq_ref, wk_ref, bk_ref, wv_ref, bv_ref,
                wo_ref, bo_ref, o_ref, *, head_num, head_dim, batch_tile):
    Bt = batch_tile
    S = x_ref.shape[1]
    C = head_num * head_dim
    cdt = x_ref.dtype                       # MXU operand dtype (bf16 on TPU)
    scale = 1.0 / math.sqrt(head_dim)

    # Fold the batch tile into M so the projection matmuls see Bt*S rows.
    x2 = x_ref[...].reshape(Bt * S, C)

    wq = wq_ref[...]
    wk = wk_ref[...]
    wv = wv_ref[...]
    wo = wo_ref[...]
    bq = bq_ref[...]
    bk = bk_ref[...]
    bv = bv_ref[...]
    bo = bo_ref[...].astype(jnp.float32)

    # Q/K/V projections: low-precision MXU operands, f32 accumulation.
    # The 1/sqrt(D) scale is applied once to q here instead of per-head on
    # every [S, S] energy matrix.
    q = (jnp.dot(x2, wq, preferred_element_type=jnp.float32) + bq) * scale
    k = jnp.dot(x2, wk, preferred_element_type=jnp.float32) + bk
    v = (jnp.dot(x2, wv, preferred_element_type=jnp.float32) + bv).astype(cdt)

    for b in range(Bt):                     # static loop over fused batch elems
        rows = slice(b * S, (b + 1) * S)    # sublane slice (S % 8 == 0): cheap
        qb = q[rows].astype(cdt)
        kb = k[rows].astype(cdt)
        vb = v[rows]

        # f32 accumulator for the output projection; heads accumulate directly
        # into it, so no concatenate of head_dim-wide (sub-128-lane) pieces.
        acc = jnp.zeros((S, C), jnp.float32)

        for h in range(head_num):           # static loop over heads
            cols = slice(h * head_dim, (h + 1) * head_dim)
            # Per-head lane slices; at C=32 / D=8 this is a handful of masked
            # selects and is cheaper than a sublane-changing relayout.
            qh = qb[:, cols]                # [S, D]
            kh = kb[:, cols]                # [S, D]
            vh = vb[:, cols]                # [S, D]

            # energy = (q / sqrt(D)) @ k^T  -> [S, S], f32 accumulation.
            energy = lax.dot_general(qh, kh, (((1,), (1,)), ((), ())),
                                     preferred_element_type=jnp.float32)

            # Numerically-stable softmax; reciprocal of the denominator runs on
            # the EUP (approx=True) instead of burning VALU cycles.
            m = jnp.max(energy, axis=-1, keepdims=True)
            p = jnp.exp(energy - m)
            denom = jnp.sum(p, axis=-1, keepdims=True)
            attn = p * pl.reciprocal(denom, approx=True)

            # out_h = attn @ v_h  -> [S, D], f32 accumulation.
            oh = jnp.dot(attn.astype(cdt), vh,
                         preferred_element_type=jnp.float32)

            # Accumulate the output projection per head:
            #   acc += out_h @ Wo[h*D:(h+1)*D, :]
            # Wo row-slice is an aligned sublane slice (first dim), cheap.
            acc = acc + jnp.dot(oh.astype(cdt), wo[cols, :],
                                preferred_element_type=jnp.float32)

        o_ref[b] = (acc + bo).astype(o_ref.dtype)


def _pick_batch_tile(B):
    if B <= 1:
        return max(B, 1)
    # Largest divisor of B that still leaves >= 2 grid steps: fattens the
    # projection matmul M dimension while keeping both v7x TensorCores busy.
    for d in range(B // 2, 0, -1):
        if B % d == 0:
            return d
    return 1


def multi_head_attention(x, params, head_num, *, batch_tile=None,
                         compute_dtype=jnp.bfloat16):
    """x: [B, C, H, W] (NCHW, like PyTorch). Returns [B, C, H, W]."""
    B, C, H, W = x.shape
    S = H * W
    head_dim = C // head_num
    assert C % head_num == 0, "in_features must be divisible by head_num"

    if batch_tile is None:
        batch_tile = _pick_batch_tile(B)
    assert B % batch_tile == 0
    grid_b = B // batch_tile

    # NCHW -> [B, S, C]  (== x.view(B, C, -1).permute(0, 2, 1)).
    # MXU operands (x and the weights) are cast to bf16 here (halves DMA bytes);
    # all accumulation and softmax math stays f32 inside the kernel.
    x_flat = jnp.transpose(x.reshape(B, C, S), (0, 2, 1)).astype(compute_dtype)

    wq = params["wq"].astype(compute_dtype)
    wk = params["wk"].astype(compute_dtype)
    wv = params["wv"].astype(compute_dtype)
    wo = params["wo"].astype(compute_dtype)
    bq, bk, bv, bo = params["bq"], params["bk"], params["bv"], params["bo"]

    kernel = functools.partial(_mha_kernel, head_num=head_num,
                               head_dim=head_dim, batch_tile=batch_tile)

    # Weights/biases have grid-invariant block indices, so they are only
    # DMA'd once.  For large C on v7x (64 MiB VMEM), add
    # pipeline_mode=pl.Buffered(1) to these specs to drop the second buffer.
    weight_spec = pl.BlockSpec((C, C), lambda b: (0, 0))
    bias_spec = pl.BlockSpec((1, C), lambda b: (0, 0))

    out_flat = pl.pallas_call(
        kernel,
        out_shape=jax.ShapeDtypeStruct((B, S, C), x.dtype),
        grid_spec=pltpu.PrefetchScalarGridSpec(
            num_scalar_prefetch=0,
            grid=(grid_b,),
            in_specs=[
                pl.BlockSpec((batch_tile, S, C), lambda b: (b, 0, 0)),  # x_flat
                weight_spec, bias_spec,      # Wq, bq
                weight_spec, bias_spec,      # Wk, bk
                weight_spec, bias_spec,      # Wv, bv
                weight_spec, bias_spec,      # Wo, bo
            ],
            out_specs=pl.BlockSpec((batch_tile, S, C), lambda b: (b, 0, 0)),
        ),
        compiler_params=pltpu.CompilerParams(
            dimension_semantics=("parallel",),
            vmem_limit_bytes=32 * 1024 * 1024),
    )(x_flat, wq, bq, wk, bk, wv, bv, wo, bo)

    # [B, S, C] -> [B, C, H, W]  (== out.permute(0, 2, 1).view(B, C, H, W))
    # TODO(synk): for C < 128 the output store is lane-masked; a lane-dense
    # [S, Bt*C] output layout only pays off for Bt >= 4, so it is not used here.
    return jnp.transpose(out_flat, (0, 2, 1)).reshape(B, C, H, W)


def init_params(key, in_features):
    """Deterministic nn.Linear-style init. Weights stored pre-transposed
    ([in, out]) so the kernel computes y = x @ W_t + b."""
    bound = 1.0 / math.sqrt(in_features)
    keys = jax.random.split(key, 8)

    def lin(kw, kb):
        w_t = jax.random.uniform(kw, (in_features, in_features),
                                 jnp.float32, -bound, bound)
        b = jax.random.uniform(kb, (1, in_features), jnp.float32, -bound, bound)
        return w_t, b

    wq, bq = lin(keys[0], keys[1])
    wk, bk = lin(keys[2], keys[3])
    wv, bv = lin(keys[4], keys[5])
    wo, bo = lin(keys[6], keys[7])
    return dict(wq=wq, bq=bq, wk=wk, bk=bk, wv=wv, bv=bv, wo=wo, bo=bo)


def reference_mha(x, params, head_num):
    """Pure-JAX f32 reference matching the PyTorch forward."""
    B, C, H, W = x.shape
    S = H * W
    D = C // head_num
    xf = jnp.transpose(x.reshape(B, C, S), (0, 2, 1))                 # [B,S,C]

    def proj(w, b):
        return xf @ w + b                                             # [B,S,C]

    q = proj(params["wq"], params["bq"]).reshape(B, S, head_num, D).transpose(0, 2, 1, 3)
    k = proj(params["wk"], params["bk"]).reshape(B, S, head_num, D).transpose(0, 2, 1, 3)
    v = proj(params["wv"], params["bv"]).reshape(B, S, head_num, D).transpose(0, 2, 1, 3)
    energy = jnp.einsum("bhqd,bhkd->bhqk", q, k) / math.sqrt(D)
    attn = jax.nn.softmax(energy, axis=-1)
    out = jnp.einsum("bhqk,bhkd->bhqd", attn, v)
    out = out.transpose(0, 2, 1, 3).reshape(B, S, C)
    out = out @ params["wo"] + params["bo"]
    return jnp.transpose(out, (0, 2, 1)).reshape(B, C, H, W)


if __name__ == "__main__":
    B, C, H, W = 2, 32, 8, 8          # in_features=32, spatial 8x8 -> seq 64
    head_num = 4

    key = jax.random.PRNGKey(0)
    kx, kp = jax.random.split(key)
    x = jax.random.normal(kx, (B, C, H, W), jnp.float32)
    params = init_params(kp, C)

    out = multi_head_attention(x, params, head_num)
    out = jax.block_until_ready(out)

    ref = reference_mha(x, params, head_num)
    assert out.shape == (B, C, H, W)
    # bf16 MXU operands + approx reciprocal => relaxed tolerance vs f32 reference.
    assert jnp.allclose(out, ref, atol=3e-2, rtol=3e-2), "mismatch vs reference"

    print("KERNEL_OK")
</pallas_src>

<mosaic_0001>
module attributes {stable_mosaic.version = 11 : i64} {
  func.func @_mha_kernel(%arg0: i32, %arg1: memref<1x64x32xbf16, #tpu.memory_space<vmem>>, %arg2: memref<32x32xbf16, #tpu.memory_space<vmem>>, %arg3: memref<1x32xf32, #tpu.memory_space<vmem>>, %arg4: memref<32x32xbf16, #tpu.memory_space<vmem>>, %arg5: memref<1x32xf32, #tpu.memory_space<vmem>>, %arg6: memref<32x32xbf16, #tpu.memory_space<vmem>>, %arg7: memref<1x32xf32, #tpu.memory_space<vmem>>, %arg8: memref<32x32xbf16, #tpu.memory_space<vmem>>, %arg9: memref<1x32xf32, #tpu.memory_space<vmem>>, %arg10: memref<1x64x32xf32, #tpu.memory_space<vmem>>) attributes {dimension_semantics = [#tpu.dimension_semantics<parallel>], iteration_bounds = array<i64: 2>, scalar_prefetch = 0 : i64, scratch_operands = 0 : i64, tpu.core_type = #tpu.core_type<tc>, window_params = [{transform_indices = @transform_0, window_bounds = array<i64: 1, 64, 32>}, {pipeline_mode = #tpu.pipeline_mode<synchronous>, transform_indices = @transform_1, window_bounds = array<i64: 32, 32>}, {pipeline_mode = #tpu.pipeline_mode<synchronous>, transform_indices = @transform_2, window_bounds = array<i64: 1, 32>}, {pipeline_mode = #tpu.pipeline_mode<synchronous>, transform_indices = @transform_3, window_bounds = array<i64: 32, 32>}, {pipeline_mode = #tpu.pipeline_mode<synchronous>, transform_indices = @transform_4, window_bounds = array<i64: 1, 32>}, {pipeline_mode = #tpu.pipeline_mode<synchronous>, transform_indices = @transform_5, window_bounds = array<i64: 32, 32>}, {pipeline_mode = #tpu.pipeline_mode<synchronous>, transform_indices = @transform_6, window_bounds = array<i64: 1, 32>}, {pipeline_mode = #tpu.pipeline_mode<synchronous>, transform_indices = @transform_7, window_bounds = array<i64: 32, 32>}, {pipeline_mode = #tpu.pipeline_mode<synchronous>, transform_indices = @transform_8, window_bounds = array<i64: 1, 32>}, {transform_indices = @transform_9, window_bounds = array<i64: 1, 64, 32>}]} {
    %c0 = arith.constant 0 : index
    %c0_0 = arith.constant 0 : index
    %c0_1 = arith.constant 0 : index
    %0 = vector.load %arg1[%c0, %c0_0, %c0_1] : memref<1x64x32xbf16, #tpu.memory_space<vmem>>, vector<1x64x32xbf16>
    %1 = vector.shape_cast %0 : vector<1x64x32xbf16> to vector<64x32xbf16>
    %c0_2 = arith.constant 0 : index
    %c0_3 = arith.constant 0 : index
    %2 = vector.load %arg2[%c0_2, %c0_3] : memref<32x32xbf16, #tpu.memory_space<vmem>>, vector<32x32xbf16>
    %c0_4 = arith.constant 0 : index
    %c0_5 = arith.constant 0 : index
    %3 = vector.load %arg4[%c0_4, %c0_5] : memref<32x32xbf16, #tpu.memory_space<vmem>>, vector<32x32xbf16>
    %c0_6 = arith.constant 0 : index
    %c0_7 = arith.constant 0 : index
    %4 = vector.load %arg6[%c0_6, %c0_7] : memref<32x32xbf16, #tpu.memory_space<vmem>>, vector<32x32xbf16>
    %c0_8 = arith.constant 0 : index
    %c0_9 = arith.constant 0 : index
    %5 = vector.load %arg8[%c0_8, %c0_9] : memref<32x32xbf16, #tpu.memory_space<vmem>>, vector<32x32xbf16>
    %c0_10 = arith.constant 0 : index
    %c0_11 = arith.constant 0 : index
    %6 = vector.load %arg3[%c0_10, %c0_11] : memref<1x32xf32, #tpu.memory_space<vmem>>, vector<1x32xf32>
    %c0_12 = arith.constant 0 : index
    %c0_13 = arith.constant 0 : index
    %7 = vector.load %arg5[%c0_12, %c0_13] : memref<1x32xf32, #tpu.memory_space<vmem>>, vector<1x32xf32>
    %c0_14 = arith.constant 0 : index
    %c0_15 = arith.constant 0 : index
    %8 = vector.load %arg7[%c0_14, %c0_15] : memref<1x32xf32, #tpu.memory_space<vmem>>, vector<1x32xf32>
    %c0_16 = arith.constant 0 : index
    %c0_17 = arith.constant 0 : index
    %9 = vector.load %arg9[%c0_16, %c0_17] : memref<1x32xf32, #tpu.memory_space<vmem>>, vector<1x32xf32>
    %cst = arith.constant dense<0.000000e+00> : vector<64x32xf32>
    %10 = tpu.matmul %1, %2, %cst {dimension_numbers = #tpu.dot_dimension_numbers<[1], [0], [0], [1], [0, 0, 1, 1], [], []>} : vector<64x32xbf16>, vector<32x32xbf16>, vector<64x32xf32> -> vector<64x32xf32>
    %11 = vector.broadcast %6 : vector<1x32xf32> to vector<64x32xf32>
    %12 = arith.addf %10, %11 : vector<64x32xf32>
    %cst_18 = arith.constant 0.353553385 : f32
    %13 = vector.broadcast %cst_18 : f32 to vector<64x32xf32>
    %14 = arith.mulf %12, %13 : vector<64x32xf32>
    %cst_19 = arith.constant dense<0.000000e+00> : vector<64x32xf32>
    %15 = tpu.matmul %1, %3, %cst_19 {dimension_numbers = #tpu.dot_dimension_numbers<[1], [0], [0], [1], [0, 0, 1, 1], [], []>} : vector<64x32xbf16>, vector<32x32xbf16>, vector<64x32xf32> -> vector<64x32xf32>
    %16 = vector.broadcast %7 : vector<1x32xf32> to vector<64x32xf32>
    %17 = arith.addf %15, %16 : vector<64x32xf32>
    %cst_20 = arith.constant dense<0.000000e+00> : vector<64x32xf32>
    %18 = tpu.matmul %1, %4, %cst_20 {dimension_numbers = #tpu.dot_dimension_numbers<[1], [0], [0], [1], [0, 0, 1, 1], [], []>} : vector<64x32xbf16>, vector<32x32xbf16>, vector<64x32xf32> -> vector<64x32xf32>
    %19 = vector.broadcast %8 : vector<1x32xf32> to vector<64x32xf32>
    %20 = arith.addf %18, %19 : vector<64x32xf32>
    %21 = arith.truncf %20 : vector<64x32xf32> to vector<64x32xbf16>
    %22 = arith.truncf %14 : vector<64x32xf32> to vector<64x32xbf16>
    %23 = arith.truncf %17 : vector<64x32xf32> to vector<64x32xbf16>
    %cst_21 = arith.constant 0.000000e+00 : f32
    %24 = vector.broadcast %cst_21 : f32 to vector<64x32xf32>
    %25 = vector.extract_strided_slice %22 {offsets = [0, 0], sizes = [64, 8], strides = [1, 1]} : vector<64x32xbf16> to vector<64x8xbf16>
    %26 = vector.extract_strided_slice %23 {offsets = [0, 0], sizes = [64, 8], strides = [1, 1]} : vector<64x32xbf16> to vector<64x8xbf16>
    %27 = vector.extract_strided_slice %21 {offsets = [0, 0], sizes = [64, 8], strides = [1, 1]} : vector<64x32xbf16> to vector<64x8xbf16>
    %cst_22 = arith.constant dense<0.000000e+00> : vector<64x64xf32>
    %28 = tpu.matmul %25, %26, %cst_22 {dimension_numbers = #tpu.dot_dimension_numbers<[1], [1], [0], [0], [0, 0, 1, 0], [], []>} : vector<64x8xbf16>, vector<64x8xbf16>, vector<64x64xf32> -> vector<64x64xf32>
    %cst_23 = arith.constant dense<0xFF800000> : vector<64xf32>
    %29 = vector.multi_reduction <maximumf>, %28, %cst_23 [1] : vector<64x64xf32> to vector<64xf32>
    %30 = vector.shape_cast %29 : vector<64xf32> to vector<64x1xf32>
    %31 = vector.broadcast %30 : vector<64x1xf32> to vector<64x64xf32>
    %32 = arith.subf %28, %31 : vector<64x64xf32>
    %33 = math.exp %32 : vector<64x64xf32>
    %cst_24 = arith.constant dense<0.000000e+00> : vector<64xf32>
    %34 = vector.multi_reduction <add>, %33, %cst_24 [1] : vector<64x64xf32> to vector<64xf32>
    %35 = vector.shape_cast %34 : vector<64xf32> to vector<64x1xf32>
    %36 = tpu.reciprocal %35 {approx = true} : vector<64x1xf32> -> vector<64x1xf32>
    %37 = vector.broadcast %36 : vector<64x1xf32> to vector<64x64xf32>
    %38 = arith.mulf %33, %37 : vector<64x64xf32>
    %39 = arith.truncf %38 : vector<64x64xf32> to vector<64x64xbf16>
    %cst_25 = arith.constant dense<0.000000e+00> : vector<64x8xf32>
    %40 = tpu.matmul %39, %27, %cst_25 {dimension_numbers = #tpu.dot_dimension_numbers<[1], [0], [0], [1], [0, 0, 1, 1], [], []>} : vector<64x64xbf16>, vector<64x8xbf16>, vector<64x8xf32> -> vector<64x8xf32>
    %41 = arith.truncf %40 : vector<64x8xf32> to vector<64x8xbf16>
    %42 = vector.extract_strided_slice %5 {offsets = [0, 0], sizes = [8, 32], strides = [1, 1]} : vector<32x32xbf16> to vector<8x32xbf16>
    %cst_26 = arith.constant dense<0.000000e+00> : vector<64x32xf32>
    %43 = tpu.matmul %41, %42, %cst_26 {dimension_numbers = #tpu.dot_dimension_numbers<[1], [0], [0], [1], [0, 0, 1, 1], [], []>} : vector<64x8xbf16>, vector<8x32xbf16>, vector<64x32xf32> -> vector<64x32xf32>
    %44 = arith.addf %24, %43 : vector<64x32xf32>
    %45 = vector.extract_strided_slice %22 {offsets = [0, 8], sizes = [64, 8], strides = [1, 1]} : vector<64x32xbf16> to vector<64x8xbf16>
    %46 = vector.extract_strided_slice %23 {offsets = [0, 8], sizes = [64, 8], strides = [1, 1]} : vector<64x32xbf16> to vector<64x8xbf16>
    %47 = vector.extract_strided_slice %21 {offsets = [0, 8], sizes = [64, 8], strides = [1, 1]} : vector<64x32xbf16> to vector<64x8xbf16>
    %cst_27 = arith.constant dense<0.000000e+00> : vector<64x64xf32>
    %48 = tpu.matmul %45, %46, %cst_27 {dimension_numbers = #tpu.dot_dimension_numbers<[1], [1], [0], [0], [0, 0, 1, 0], [], []>} : vector<64x8xbf16>, vector<64x8xbf16>, vector<64x64xf32> -> vector<64x64xf32>
    %cst_28 = arith.constant dense<0xFF800000> : vector<64xf32>
    %49 = vector.multi_reduction <maximumf>, %48, %cst_28 [1] : vector<64x64xf32> to vector<64xf32>
    %50 = vector.shape_cast %49 : vector<64xf32> to vector<64x1xf32>
    %51 = vector.broadcast %50 : vector<64x1xf32> to vector<64x64xf32>
    %52 = arith.subf %48, %51 : vector<64x64xf32>
    %53 = math.exp %52 : vector<64x64xf32>
    %cst_29 = arith.constant dense<0.000000e+00> : vector<64xf32>
    %54 = vector.multi_reduction <add>, %53, %cst_29 [1] : vector<64x64xf32> to vector<64xf32>
    %55 = vector.shape_cast %54 : vector<64xf32> to vector<64x1xf32>
    %56 = tpu.reciprocal %55 {approx = true} : vector<64x1xf32> -> vector<64x1xf32>
    %57 = vector.broadcast %56 : vector<64x1xf32> to vector<64x64xf32>
    %58 = arith.mulf %53, %57 : vector<64x64xf32>
    %59 = arith.truncf %58 : vector<64x64xf32> to vector<64x64xbf16>
    %cst_30 = arith.constant dense<0.000000e+00> : vector<64x8xf32>
    %60 = tpu.matmul %59, %47, %cst_30 {dimension_numbers = #tpu.dot_dimension_numbers<[1], [0], [0], [1], [0, 0, 1, 1], [], []>} : vector<64x64xbf16>, vector<64x8xbf16>, vector<64x8xf32> -> vector<64x8xf32>
    %61 = arith.truncf %60 : vector<64x8xf32> to vector<64x8xbf16>
    %62 = vector.extract_strided_slice %5 {offsets = [8, 0], sizes = [8, 32], strides = [1, 1]} : vector<32x32xbf16> to vector<8x32xbf16>
    %cst_31 = arith.constant dense<0.000000e+00> : vector<64x32xf32>
    %63 = tpu.matmul %61, %62, %cst_31 {dimension_numbers = #tpu.dot_dimension_numbers<[1], [0], [0], [1], [0, 0, 1, 1], [], []>} : vector<64x8xbf16>, vector<8x32xbf16>, vector<64x32xf32> -> vector<64x32xf32>
    %64 = arith.addf %44, %63 : vector<64x32xf32>
    %65 = vector.extract_strided_slice %22 {offsets = [0, 16], sizes = [64, 8], strides = [1, 1]} : vector<64x32xbf16> to vector<64x8xbf16>
    %66 = vector.extract_strided_slice %23 {offsets = [0, 16], sizes = [64, 8], strides = [1, 1]} : vector<64x32xbf16> to vector<64x8xbf16>
    %67 = vector.extract_strided_slice %21 {offsets = [0, 16], sizes = [64, 8], strides = [1, 1]} : vector<64x32xbf16> to vector<64x8xbf16>
    %cst_32 = arith.constant dense<0.000000e+00> : vector<64x64xf32>
    %68 = tpu.matmul %65, %66, %cst_32 {dimension_numbers = #tpu.dot_dimension_numbers<[1], [1], [0], [0], [0, 0, 1, 0], [], []>} : vector<64x8xbf16>, vector<64x8xbf16>, vector<64x64xf32> -> vector<64x64xf32>
    %cst_33 = arith.constant dense<0xFF800000> : vector<64xf32>
    %69 = vector.multi_reduction <maximumf>, %68, %cst_33 [1] : vector<64x64xf32> to vector<64xf32>
    %70 = vector.shape_cast %69 : vector<64xf32> to vector<64x1xf32>
    %71 = vector.broadcast %70 : vector<64x1xf32> to vector<64x64xf32>
    %72 = arith.subf %68, %71 : vector<64x64xf32>
    %73 = math.exp %72 : vector<64x64xf32>
    %cst_34 = arith.constant dense<0.000000e+00> : vector<64xf32>
    %74 = vector.multi_reduction <add>, %73, %cst_34 [1] : vector<64x64xf32> to vector<64xf32>
    %75 = vector.shape_cast %74 : vector<64xf32> to vector<64x1xf32>
    %76 = tpu.reciprocal %75 {approx = true} : vector<64x1xf32> -> vector<64x1xf32>
    %77 = vector.broadcast %76 : vector<64x1xf32> to vector<64x64xf32>
    %78 = arith.mulf %73, %77 : vector<64x64xf32>
    %79 = arith.truncf %78 : vector<64x64xf32> to vector<64x64xbf16>
    %cst_35 = arith.constant dense<0.000000e+00> : vector<64x8xf32>
    %80 = tpu.matmul %79, %67, %cst_35 {dimension_numbers = #tpu.dot_dimension_numbers<[1], [0], [0], [1], [0, 0, 1, 1], [], []>} : vector<64x64xbf16>, vector<64x8xbf16>, vector<64x8xf32> -> vector<64x8xf32>
    %81 = arith.truncf %80 : vector<64x8xf32> to vector<64x8xbf16>
    %82 = vector.extract_strided_slice %5 {offsets = [16, 0], sizes = [8, 32], strides = [1, 1]} : vector<32x32xbf16> to vector<8x32xbf16>
    %cst_36 = arith.constant dense<0.000000e+00> : vector<64x32xf32>
    %83 = tpu.matmul %81, %82, %cst_36 {dimension_numbers = #tpu.dot_dimension_numbers<[1], [0], [0], [1], [0, 0, 1, 1], [], []>} : vector<64x8xbf16>, vector<8x32xbf16>, vector<64x32xf32> -> vector<64x32xf32>
    %84 = arith.addf %64, %83 : vector<64x32xf32>
    %85 = vector.extract_strided_slice %22 {offsets = [0, 24], sizes = [64, 8], strides = [1, 1]} : vector<64x32xbf16> to vector<64x8xbf16>
    %86 = vector.extract_strided_slice %23 {offsets = [0, 24], sizes = [64, 8], strides = [1, 1]} : vector<64x32xbf16> to vector<64x8xbf16>
    %87 = vector.extract_strided_slice %21 {offsets = [0, 24], sizes = [64, 8], strides = [1, 1]} : vector<64x32xbf16> to vector<64x8xbf16>
    %cst_37 = arith.constant dense<0.000000e+00> : vector<64x64xf32>
    %88 = tpu.matmul %85, %86, %cst_37 {dimension_numbers = #tpu.dot_dimension_numbers<[1], [1], [0], [0], [0, 0, 1, 0], [], []>} : vector<64x8xbf16>, vector<64x8xbf16>, vector<64x64xf32> -> vector<64x64xf32>
    %cst_38 = arith.constant dense<0xFF800000> : vector<64xf32>
    %89 = vector.multi_reduction <maximumf>, %88, %cst_38 [1] : vector<64x64xf32> to vector<64xf32>
    %90 = vector.shape_cast %89 : vector<64xf32> to vector<64x1xf32>
    %91 = vector.broadcast %90 : vector<64x1xf32> to vector<64x64xf32>
    %92 = arith.subf %88, %91 : vector<64x64xf32>
    %93 = math.exp %92 : vector<64x64xf32>
    %cst_39 = arith.constant dense<0.000000e+00> : vector<64xf32>
    %94 = vector.multi_reduction <add>, %93, %cst_39 [1] : vector<64x64xf32> to vector<64xf32>
    %95 = vector.shape_cast %94 : vector<64xf32> to vector<64x1xf32>
    %96 = tpu.reciprocal %95 {approx = true} : vector<64x1xf32> -> vector<64x1xf32>
    %97 = vector.broadcast %96 : vector<64x1xf32> to vector<64x64xf32>
    %98 = arith.mulf %93, %97 : vector<64x64xf32>
    %99 = arith.truncf %98 : vector<64x64xf32> to vector<64x64xbf16>
    %cst_40 = arith.constant dense<0.000000e+00> : vector<64x8xf32>
    %100 = tpu.matmul %99, %87, %cst_40 {dimension_numbers = #tpu.dot_dimension_numbers<[1], [0], [0], [1], [0, 0, 1, 1], [], []>} : vector<64x64xbf16>, vector<64x8xbf16>, vector<64x8xf32> -> vector<64x8xf32>
    %101 = arith.truncf %100 : vector<64x8xf32> to vector<64x8xbf16>
    %102 = vector.extract_strided_slice %5 {offsets = [24, 0], sizes = [8, 32], strides = [1, 1]} : vector<32x32xbf16> to vector<8x32xbf16>
    %cst_41 = arith.constant dense<0.000000e+00> : vector<64x32xf32>
    %103 = tpu.matmul %101, %102, %cst_41 {dimension_numbers = #tpu.dot_dimension_numbers<[1], [0], [0], [1], [0, 0, 1, 1], [], []>} : vector<64x8xbf16>, vector<8x32xbf16>, vector<64x32xf32> -> vector<64x32xf32>
    %104 = arith.addf %84, %103 : vector<64x32xf32>
    %105 = vector.broadcast %9 : vector<1x32xf32> to vector<64x32xf32>
    %106 = arith.addf %104, %105 : vector<64x32xf32>
    %c0_42 = arith.constant 0 : index
    %c0_43 = arith.constant 0 : index
    %c0_44 = arith.constant 0 : index
    %107 = vector.load %arg10[%c0_42, %c0_43, %c0_44] : memref<1x64x32xf32, #tpu.memory_space<vmem>>, vector<1x64x32xf32>
    %108 = vector.shape_cast %107 : vector<1x64x32xf32> to vector<64x32xf32>
    %109 = vector.shape_cast %106 : vector<64x32xf32> to vector<1x64x32xf32>
    tpu.vector_store %arg10[%c0_42, %c0_43, %c0_44], %109 {strides = array<i32>} : memref<1x64x32xf32, #tpu.memory_space<vmem>>, vector<1x64x32xf32>,
    return
  }
  func.func @transform_0(%arg0: i32) -> (i32, i32, i32) {
    %c0_i32 = arith.constant 0 : i32
    %c0_i32_0 = arith.constant 0 : i32
    %c0_i32_1 = arith.constant 0 : i32
    return %arg0, %c0_i32, %c0_i32_0 : i32, i32, i32
  }
  func.func @transform_1(%arg0: i32) -> (i32, i32) {
    %c0_i32 = arith.constant 0 : i32
    %c0_i32_0 = arith.constant 0 : i32
    %c0_i32_1 = arith.constant 0 : i32
    return %c0_i32, %c0_i32_0 : i32, i32
  }
  func.func @transform_2(%arg0: i32) -> (i32, i32) {
    %c0_i32 = arith.constant 0 : i32
    %c0_i32_0 = arith.constant 0 : i32
    %c0_i32_1 = arith.constant 0 : i32
    return %c0_i32, %c0_i32_0 : i32, i32
  }
  func.func @transform_3(%arg0: i32) -> (i32, i32) {
    %c0_i32 = arith.constant 0 : i32
    %c0_i32_0 = arith.constant 0 : i32
    %c0_i32_1 = arith.constant 0 : i32
    return %c0_i32, %c0_i32_0 : i32, i32
  }
  func.func @transform_4(%arg0: i32) -> (i32, i32) {
    %c0_i32 = arith.constant 0 : i32
    %c0_i32_0 = arith.constant 0 : i32
    %c0_i32_1 = arith.constant 0 : i32
    return %c0_i32, %c0_i32_0 : i32, i32
  }
  func.func @transform_5(%arg0: i32) -> (i32, i32) {
    %c0_i32 = arith.constant 0 : i32
    %c0_i32_0 = arith.constant 0 : i32
    %c0_i32_1 = arith.constant 0 : i32
    return %c0_i32, %c0_i32_0 : i32, i32
  }
  func.func @transform_6(%arg0: i32) -> (i32, i32) {
    %c0_i32 = arith.constant 0 : i32
    %c0_i32_0 = arith.constant 0 : i32
    %c0_i32_1 = arith.constant 0 : i32
    return %c0_i32, %c0_i32_0 : i32, i32
  }
  func.func @transform_7(%arg0: i32) -> (i32, i32) {
    %c0_i32 = arith.constant 0 : i32
    %c0_i32_0 = arith.constant 0 : i32
    %c0_i32_1 = arith.constant 0 : i32
    return %c0_i32, %c0_i32_0 : i32, i32
  }
  func.func @transform_8(%arg0: i32) -> (i32, i32) {
    %c0_i32 = arith.constant 0 : i32
    %c0_i32_0 = arith.constant 0 : i32
    %c0_i32_1 = arith.constant 0 : i32
    return %c0_i32, %c0_i32_0 : i32, i32
  }
  func.func @transform_9(%arg0: i32) -> (i32, i32, i32) {
    %c0_i32 = arith.constant 0 : i32
    %c0_i32_0 = arith.constant 0 : i32
    %c0_i32_1 = arith.constant 0 : i32
    return %arg0, %c0_i32, %c0_i32_0 : i32, i32, i32
  }
}

</mosaic_0001>

<llo_original>
// kernel: tpu_custom_call.1
$region0: #{tpu_custom_call.1}
  #allocation0 [shape = 'u32[]', space=smem, size = 0x4, offset = 0x4, fixed_abs, tag = 'smem constant byte address 0x4 - core index']
  #allocation1 [shape = 'u32[72,128]{1,0:T(1,128)}', space=vmem, size = 0x9000, scoped, tag = 'internal scratch']
  %s0 = inlined_call_operand.vmem [shape: bf16[2,64,32], index: 0, kind: input, shape index: {}]
  %s1 = inlined_call_operand.vmem [shape: bf16[32,32], index: 1, kind: input, shape index: {}]
  %s2 = inlined_call_operand.vmem [shape: f32[1,32], index: 2, kind: input, shape index: {}]
  %s3 = inlined_call_operand.vmem [shape: bf16[32,32], index: 3, kind: input, shape index: {}]
  %s4 = inlined_call_operand.vmem [shape: f32[1,32], index: 4, kind: input, shape index: {}]
  %s5 = inlined_call_operand.vmem [shape: bf16[32,32], index: 5, kind: input, shape index: {}]
  %s6 = inlined_call_operand.vmem [shape: f32[1,32], index: 6, kind: input, shape index: {}]
  %s7 = inlined_call_operand.vmem [shape: bf16[32,32], index: 7, kind: input, shape index: {}]
  %s8 = inlined_call_operand.vmem [shape: f32[1,32], index: 8, kind: input, shape index: {}]
  %s9 = inlined_call_operand.vmem [shape: f32[2,64,32], index: 9, kind: output, shape index: {}]
  %s10 = sld [smem:[#allocation0]]
  $region69: #{tpu_custom_call.1} parent=0
    _
  %s12 = ssub.s32 1, %s10
  %s13 = scalar_select 0, %s12, %s10
  loop: start=0, step=1, limit=4
  $region2: #{tpu_custom_call.1} parent=0 // loop_pre_header
    _
  $region3: #{tpu_custom_call.1} parent=0 // loop_header
    %s15 = sphi 0, %s19
    %p16 = scmp.ge.s32.totalorder %s15, 4
    %s25 = sphi 0, %s27
    %s28 = sphi 0, %s25
    %s29 = sphi 0, %s28
    %s45 = sphi 0, %s29
    %s49 = sphi 0, %s49
    %s51 = sphi 0, %s49
    %s52 = sphi 0, %s51
    %s66 = sphi 0, %s52
    %s70 = sphi 0, %s70
    %s72 = sphi 0, %s70
    %s73 = sphi 0, %s72
    %s87 = sphi 0, %s73
    %s91 = sphi 0, %s91
    %s93 = sphi 0, %s91
    %s94 = sphi 0, %s93
    %s108 = sphi 0, %s94
    %s112 = sphi 0, %s112
    %s114 = sphi 0, %s112
    %s115 = sphi 0, %s114
    %s129 = sphi 0, %s115
    %s133 = sphi 0, %s133
    %s135 = sphi 0, %s133
    %s136 = sphi 0, %s135
    %s150 = sphi 0, %s136
    %s154 = sphi 0, %s154
    %s156 = sphi 0, %s154
    %s157 = sphi 0, %s156
    %s171 = sphi 0, %s157
    %s175 = sphi 0, %s175
    %s177 = sphi 0, %s175
    %s178 = sphi 0, %s177
    %s192 = sphi 0, %s178
    %s196 = sphi 0, %s196
    %s198 = sphi 0, %s196
    %s199 = sphi 0, %s198
    %s213 = sphi 0, %s199
    %s219 = sphi 0, %s221
    %s222 = sphi 0, %s219
    %s223 = sphi 0, %s222
    %s239 = sphi 0, %s223
  $region4: #{tpu_custom_call.1} parent=0 // loop_header_branch
    %18 = sbr.rel (%p16) target = $region8
  $region5: #{tpu_custom_call.1} parent=0 // loop_body
    %s20 = ssub.s32 %s15, 1
    %s21 = ssub.s32 %s15, 2
    %s22 = sadd.s32 %s15, 1
    %s23 = ssub.s32 %s15, %s22
    %p24 = scmp.eq.s32.totalorder %s23, 0
    %s26 = sadd.s32 %s25, 1
    %s27 = scalar_select %p24, %s25, %s26
    %p30 = pneg %p24
    %p31 = scmp.eq.s32.totalorder %s15, 1
    %p32 = por %p30, %p31
    %p33 = scmp.ne.s32.totalorder %s25, %s28
    %p34 = scmp.eq.s32.totalorder %s15, 0
    %p35 = por %p33, %p34
    %p36 = scmp.ne.s32.totalorder %s25, %s28
    %p37 = scmp.eq.s32.totalorder %s20, 1
    %p38 = por %p36, %p37
    %p39 = scmp.ne.s32.totalorder %s28, %s29
    %p40 = scmp.eq.s32.totalorder %s20, 0
    %p41 = por %p39, %p40
    %p42 = scmp.ne.s32.totalorder %s28, %s29
    %p43 = scmp.eq.s32.totalorder %s21, 1
    %p44 = por %p42, %p43
    %p46 = scmp.ne.s32.totalorder %s29, %s45
    %p47 = scmp.eq.s32.totalorder %s21, 0
    %p48 = por %p46, %p47
    %s50 = sadd.s32 %s49, 1
    %p53 = scmp.eq.s32.totalorder %s15, 1
    %p54 = scmp.ne.s32.totalorder %s49, %s51
    %p55 = scmp.eq.s32.totalorder %s15, 0
    %p56 = por %p54, %p55
    %p57 = scmp.ne.s32.totalorder %s49, %s51
    %p58 = scmp.eq.s32.totalorder %s20, 1
    %p59 = por %p57, %p58
    %p60 = scmp.ne.s32.totalorder %s51, %s52
    %p61 = scmp.eq.s32.totalorder %s20, 0
    %p62 = por %p60, %p61
    %p63 = scmp.ne.s32.totalorder %s51, %s52
    %p64 = scmp.eq.s32.totalorder %s21, 1
    %p65 = por %p63, %p64
    %p67 = scmp.ne.s32.totalorder %s52, %s66
    %p68 = scmp.eq.s32.totalorder %s21, 0
    %p69 = por %p67, %p68
    %s71 = sadd.s32 %s70, 1
    %p74 = scmp.eq.s32.totalorder %s15, 1
    %p75 = scmp.ne.s32.totalorder %s70, %s72
    %p76 = scmp.eq.s32.totalorder %s15, 0
    %p77 = por %p75, %p76
    %p78 = scmp.ne.s32.totalorder %s70, %s72
    %p79 = scmp.eq.s32.totalorder %s20, 1
    %p80 = por %p78, %p79
    %p81 = scmp.ne.s32.totalorder %s72, %s73
    %p82 = scmp.eq.s32.totalorder %s20, 0
    %p83 = por %p81, %p82
    %p84 = scmp.ne.s32.totalorder %s72, %s73
    %p85 = scmp.eq.s32.totalorder %s21, 1
    %p86 = por %p84, %p85
    %p88 = scmp.ne.s32.totalorder %s73, %s87
    %p89 = scmp.eq.s32.totalorder %s21, 0
    %p90 = por %p88, %p89
    %s92 = sadd.s32 %s91, 1
    %p95 = scmp.eq.s32.totalorder %s15, 1
    %p96 = scmp.ne.s32.totalorder %s91, %s93
    %p97 = scmp.eq.s32.totalorder %s15, 0
    %p98 = por %p96, %p97
    %p99 = scmp.ne.s32.totalorder %s91, %s93
    %p100 = scmp.eq.s32.totalorder %s20, 1
    %p101 = por %p99, %p100
    %p102 = scmp.ne.s32.totalorder %s93, %s94
    %p103 = scmp.eq.s32.totalorder %s20, 0
    %p104 = por %p102, %p103
    %p105 = scmp.ne.s32.totalorder %s93, %s94
    %p106 = scmp.eq.s32.totalorder %s21, 1
    %p107 = por %p105, %p106
    %p109 = scmp.ne.s32.totalorder %s94, %s108
    %p110 = scmp.eq.s32.totalorder %s21, 0
    %p111 = por %p109, %p110
    %s113 = sadd.s32 %s112, 1
    %p116 = scmp.eq.s32.totalorder %s15, 1
    %p117 = scmp.ne.s32.totalorder %s112, %s114
    %p118 = scmp.eq.s32.totalorder %s15, 0
    %p119 = por %p117, %p118
    %p120 = scmp.ne.s32.totalorder %s112, %s114
    %p121 = scmp.eq.s32.totalorder %s20, 1
    %p122 = por %p120, %p121
    %p123 = scmp.ne.s32.totalorder %s114, %s115
    %p124 = scmp.eq.s32.totalorder %s20, 0
    %p125 = por %p123, %p124
    %p126 = scmp.ne.s32.totalorder %s114, %s115
    %p127 = scmp.eq.s32.totalorder %s21, 1
    %p128 = por %p126, %p127
    %p130 = scmp.ne.s32.totalorder %s115, %s129
    %p131 = scmp.eq.s32.totalorder %s21, 0
    %p132 = por %p130, %p131
    %s134 = sadd.s32 %s133, 1
    %p137 = scmp.eq.s32.totalorder %s15, 1
    %p138 = scmp.ne.s32.totalorder %s133, %s135
    %p139 = scmp.eq.s32.totalorder %s15, 0
    %p140 = por %p138, %p139
    %p141 = scmp.ne.s32.totalorder %s133, %s135
    %p142 = scmp.eq.s32.totalorder %s20, 1
    %p143 = por %p141, %p142
    %p144 = scmp.ne.s32.totalorder %s135, %s136
    %p145 = scmp.eq.s32.totalorder %s20, 0
    %p146 = por %p144, %p145
    %p147 = scmp.ne.s32.totalorder %s135, %s136
    %p148 = scmp.eq.s32.totalorder %s21, 1
    %p149 = por %p147, %p148
    %p151 = scmp.ne.s32.totalorder %s136, %s150
    %p152 = scmp.eq.s32.totalorder %s21, 0
    %p153 = por %p151, %p152
    %s155 = sadd.s32 %s154, 1
    %p158 = scmp.eq.s32.totalorder %s15, 1
    %p159 = scmp.ne.s32.totalorder %s154, %s156
    %p160 = scmp.eq.s32.totalorder %s15, 0
    %p161 = por %p159, %p160
    %p162 = scmp.ne.s32.totalorder %s154, %s156
    %p163 = scmp.eq.s32.totalorder %s20, 1
    %p164 = por %p162, %p163
    %p165 = scmp.ne.s32.totalorder %s156, %s157
    %p166 = scmp.eq.s32.totalorder %s20, 0
    %p167 = por %p165, %p166
    %p168 = scmp.ne.s32.totalorder %s156, %s157
    %p169 = scmp.eq.s32.totalorder %s21, 1
    %p170 = por %p168, %p169
    %p172 = scmp.ne.s32.totalorder %s157, %s171
    %p173 = scmp.eq.s32.totalorder %s21, 0
    %p174 = por %p172, %p173
    %s176 = sadd.s32 %s175, 1
    %p179 = scmp.eq.s32.totalorder %s15, 1
    %p180 = scmp.ne.s32.totalorder %s175, %s177
    %p181 = scmp.eq.s32.totalorder %s15, 0
    %p182 = por %p180, %p181
    %p183 = scmp.ne.s32.totalorder %s175, %s177
    %p184 = scmp.eq.s32.totalorder %s20, 1
    %p185 = por %p183, %p184
    %p186 = scmp.ne.s32.totalorder %s177, %s178
    %p187 = scmp.eq.s32.totalorder %s20, 0
    %p188 = por %p186, %p187
    %p189 = scmp.ne.s32.totalorder %s177, %s178
    %p190 = scmp.eq.s32.totalorder %s21, 1
    %p191 = por %p189, %p190
    %p193 = scmp.ne.s32.totalorder %s178, %s192
    %p194 = scmp.eq.s32.totalorder %s21, 0
    %p195 = por %p193, %p194
    %s197 = sadd.s32 %s196, 1
    %p200 = scmp.eq.s32.totalorder %s15, 1
    %p201 = scmp.ne.s32.totalorder %s196, %s198
    %p202 = scmp.eq.s32.totalorder %s15, 0
    %p203 = por %p201, %p202
    %p204 = scmp.ne.s32.totalorder %s196, %s198
    %p205 = scmp.eq.s32.totalorder %s20, 1
    %p206 = por %p204, %p205
    %p207 = scmp.ne.s32.totalorder %s198, %s199
    %p208 = scmp.eq.s32.totalorder %s20, 0
    %p209 = por %p207, %p208
    %p210 = scmp.ne.s32.totalorder %s198, %s199
    %p211 = scmp.eq.s32.totalorder %s21, 1
    %p212 = por %p210, %p211
    %p214 = scmp.ne.s32.totalorder %s199, %s213
    %p215 = scmp.eq.s32.totalorder %s21, 0
    %p216 = por %p214, %p215
    %s217 = ssub.s32 %s15, %s22
    %p218 = scmp.eq.s32.totalorder %s217, 0
    %s220 = sadd.s32 %s219, 1
    %s221 = scalar_select %p218, %s219, %s220
    %p224 = pneg %p218
    %p225 = scmp.eq.s32.totalorder %s15, 1
    %p226 = por %p224, %p225
    %p227 = scmp.ne.s32.totalorder %s219, %s222
    %p228 = scmp.eq.s32.totalorder %s15, 0
    %p229 = por %p227, %p228
    %p230 = scmp.ne.s32.totalorder %s219, %s222
    %p231 = scmp.eq.s32.totalorder %s20, 1
    %p232 = por %p230, %p231
    %p233 = scmp.ne.s32.totalorder %s222, %s223
    %p234 = scmp.eq.s32.totalorder %s20, 0
    %p235 = por %p233, %p234
    %p236 = scmp.ne.s32.totalorder %s222, %s223
    %p237 = scmp.eq.s32.totalorder %s21, 1
    %p238 = por %p236, %p237
    %p240 = scmp.ne.s32.totalorder %s223, %s239
    %p241 = scmp.eq.s32.totalorder %s21, 0
    %p242 = por %p240, %p241
    %p243 = scmp.le.s32.totalorder 1, %s15
    %p244 = scmp.lt.s32.totalorder %s15, 3
    %p245 = pnand %p243, %p244
    %p246 = pneg %p245
    // Predicated region
    $region9: #{tpu_custom_call.1} parent=5 // pred_check
      _
    $region10: #{tpu_custom_call.1} parent=5 // pred_check_branch
      %248 = sbr.rel (%p245) target = $region12
    $region11: #{tpu_custom_call.1} parent=5 // pred_region
      %s249 = ssub.s32 %s15, 1
      // Predicated region
      $region13: #{tpu_custom_call.1} parent=11 // pred_check
        %p250 = pneg %p62
      $region14: #{tpu_custom_call.1} parent=11 // pred_check_branch
        %252 = sbr.rel (%p250) target = $region16
      $region15: #{tpu_custom_call.1} parent=11 // pred_region
        _
      $region16: #{tpu_custom_call.1} parent=11 // pred_fallthru
        _
      // Predicated region
      $region17: #{tpu_custom_call.1} parent=11 // pred_check
        %p253 = pneg %p83
      $region18: #{tpu_custom_call.1} parent=11 // pred_check_branch
        %255 = sbr.rel (%p253) target = $region20
      $region19: #{tpu_custom_call.1} parent=11 // pred_region
        _
      $region20: #{tpu_custom_call.1} parent=11 // pred_fallthru
        _
      // Predicated region
      $region21: #{tpu_custom_call.1} parent=11 // pred_check
        %p256 = pneg %p104
      $region22: #{tpu_custom_call.1} parent=11 // pred_check_branch
        %258 = sbr.rel (%p256) target = $region24
      $region23: #{tpu_custom_call.1} parent=11 // pred_region
        _
      $region24: #{tpu_custom_call.1} parent=11 // pred_fallthru
        _
      // Predicated region
      $region25: #{tpu_custom_call.1} parent=11 // pred_check
        %p259 = pneg %p125
      $region26: #{tpu_custom_call.1} parent=11 // pred_check_branch
        %261 = sbr.rel (%p259) target = $region28
      $region27: #{tpu_custom_call.1} parent=11 // pred_region
        _
      $region28: #{tpu_custom_call.1} parent=11 // pred_fallthru
        _
      // Predicated region
      $region29: #{tpu_custom_call.1} parent=11 // pred_check
        %p262 = pneg %p146
      $region30: #{tpu_custom_call.1} parent=11 // pred_check_branch
        %264 = sbr.rel (%p262) target = $region32
      $region31: #{tpu_custom_call.1} parent=11 // pred_region
        _
      $region32: #{tpu_custom_call.1} parent=11 // pred_fallthru
        _
      // Predicated region
      $region33: #{tpu_custom_call.1} parent=11 // pred_check
        %p265 = pneg %p167
      $region34: #{tpu_custom_call.1} parent=11 // pred_check_branch
        %267 = sbr.rel (%p265) target = $region36
      $region35: #{tpu_custom_call.1} parent=11 // pred_region
        _
      $region36: #{tpu_custom_call.1} parent=11 // pred_fallthru
        _
      // Predicated region
      $region37: #{tpu_custom_call.1} parent=11 // pred_check
        %p268 = pneg %p188
      $region38: #{tpu_custom_call.1} parent=11 // pred_check_branch
        %270 = sbr.rel (%p268) target = $region40
      $region39: #{tpu_custom_call.1} parent=11 // pred_region
        _
      $region40: #{tpu_custom_call.1} parent=11 // pred_fallthru
        _
      // Predicated region
      $region41: #{tpu_custom_call.1} parent=11 // pred_check
        %p271 = pneg %p209
      $region42: #{tpu_custom_call.1} parent=11 // pred_check_branch
        %273 = sbr.rel (%p271) target = $region44
      $region43: #{tpu_custom_call.1} parent=11 // pred_region
        _
      $region44: #{tpu_custom_call.1} parent=11 // pred_fallthru
        _
    $region12: #{tpu_custom_call.1} parent=5 // pred_fallthru
      _
    %p274 = scmp.lt.s32.totalorder %s15, 2
    // Predicated region
    $region45: #{tpu_custom_call.1} parent=5 // pred_check
      %p275 = pneg %p274
    $region46: #{tpu_custom_call.1} parent=5 // pred_check_branch
      %277 = sbr.rel (%p275) target = $region48
    $region47: #{tpu_custom_call.1} parent=5 // pred_region
      // Predicated region
      $region49: #{tpu_custom_call.1} parent=47 // pred_check
        %p278 = pneg %p35
      $region50: #{tpu_custom_call.1} parent=47 // pred_check_branch
        %280 = sbr.rel (%p278) target = $region52
      $region51: #{tpu_custom_call.1} parent=47 // pred_region
        %p281 = scmp.lt.s32.totalorder %s15, 1
        %s282 = scalar_select %p281, %s15, 1
        %s283 = smul.addr %s282, 8
        %s284 = smul.addr %s283, 4
        %s285 = scalar_lea.vmem %s0, %s284
      $region52: #{tpu_custom_call.1} parent=47 // pred_fallthru
        _
    $region48: #{tpu_custom_call.1} parent=5 // pred_fallthru
      _
    %p286 = scmp.le.s32.totalorder 1, %s15
    %p287 = scmp.lt.s32.totalorder %s15, 3
    %p288 = pnand %p286, %p287
    %p289 = pneg %p288
    // Predicated region
    $region53: #{tpu_custom_call.1} parent=5 // pred_check
      _
    $region54: #{tpu_custom_call.1} parent=5 // pred_check_branch
      %291 = sbr.rel (%p288) target = $region56
    $region55: #{tpu_custom_call.1} parent=5 // pred_region
      %s292 = ssub.s32 %s15, 1
      %p293 = scmp.lt.s32.totalorder %s20, 1
      %s294 = scalar_select %p293, %s20, 1
      %s295 = smul.addr %s294, 8
      %s296 = smul.addr %s295, 4
      %s297 = scalar_lea.vmem %s0, %s296
      %p298 = pneg %p41
      %p299 = pneg %p38
      %p300 = pneg %p62
      %p301 = pneg %p59
      %p302 = pneg %p83
      %p303 = pneg %p80
      %p304 = pneg %p104
      %p305 = pneg %p101
      %p306 = pneg %p125
      %p307 = pneg %p122
      %p308 = pneg %p146
      %p309 = pneg %p143
      %p310 = pneg %p167
      %p311 = pneg %p164
      %p312 = pneg %p188
      %p313 = pneg %p185
      %p314 = pneg %p209
      %p315 = pneg %p206
      %p316 = pneg %p235
      %p317 = pneg %p232
      %p318 = scmp.lt.s32.totalorder %s20, 1
      %s319 = scalar_select %p318, %s20, 1
      %s320 = smul.addr %s319, 8
      %s321 = smul.addr %s320, 8
      %s322 = scalar_lea.vmem %s9, %s321
      %p323 = scmp.lt.s32.totalorder %s20, 1
      %s324 = scalar_select %p323, %s20, 1
      %s325 = smul.addr %s324, 8
      %s326 = smul.addr %s325, 4
      %s327 = scalar_lea.vmem %s0, %s326
      %p328 = scmp.lt.s32.totalorder %s20, 1
      %s329 = scalar_select %p328, %s20, 1
      %s330 = smul.addr %s329, 8
      %s331 = smul.addr %s330, 8
      %s332 = scalar_lea.vmem %s9, %s331
      %v334 = vld [vmem:[%s327] sm:$0xf]
      %v335 = vld [vmem:[%s327 + $0x4] sm:$0xf]
      %v336 = vld [vmem:[%s327 + $0x8] sm:$0xf]
      %v337 = vld [vmem:[%s327 + $0xc] sm:$0xf]
      %v338 = vld [vmem:[%s327 + $0x10] sm:$0xf]
      %v339 = vld [vmem:[%s327 + $0x14] sm:$0xf]
      %v340 = vld [vmem:[%s327 + $0x18] sm:$0xf]
      %v341 = vld [vmem:[%s327 + $0x1c] sm:$0xf]
      %v342 = vld [vmem:[%s1] sm:$0xf]
      %v343 = vld [vmem:[%s1 + $0x4] sm:$0xf]
      %v344 = vld [vmem:[%s1 + $0x8] sm:$0xf]
      %v345 = vld [vmem:[%s1 + $0xc] sm:$0xf]
      %v346 = vld [vmem:[%s3] sm:$0xf]
      %v347 = vld [vmem:[%s3 + $0x4] sm:$0xf]
      %v348 = vld [vmem:[%s3 + $0x8] sm:$0xf]
      %v349 = vld [vmem:[%s3 + $0xc] sm:$0xf]
      %v350 = vld [vmem:[%s5] sm:$0xf]
      %v351 = vld [vmem:[%s5 + $0x4] sm:$0xf]
      %v352 = vld [vmem:[%s5 + $0x8] sm:$0xf]
      %v353 = vld [vmem:[%s5 + $0xc] sm:$0xf]
      %v354 = vld [vmem:[%s7] sm:$0xf]
      %v355 = vld [vmem:[%s7 + $0x4] sm:$0xf]
      %v356 = vld [vmem:[%s7 + $0x8] sm:$0xf]
      %v357 = vld [vmem:[%s7 + $0xc] sm:$0xf]
      %v358 = vld [vmem:[%s2] sm:$0x1]
      %v359 = vld [vmem:[%s4] sm:$0x1]
      %v360 = vld [vmem:[%s6] sm:$0x1]
      %v361 = vld [vmem:[%s8] sm:$0x1]
      %v363 = vperm.slane %v358, 0
      %v373 = vunpack.c.l.b16 %v334
      %v374 = vunpack.c.l.b16 %v335
      %v375 = vunpack.c.l.b16 %v336
      %v376 = vunpack.c.l.b16 %v337
      %v377 = vunpack.c.l.b16 %v338
      %v378 = vunpack.c.l.b16 %v339
      %v379 = vunpack.c.l.b16 %v340
      %v380 = vunpack.c.l.b16 %v341
      %v381 = vpack.c.b16 %v374, %v373
      %v382 = vpack.c.b16 %v376, %v375
      %v383 = vpack.c.b16 %v378, %v377
      %v384 = vpack.c.b16 %v380, %v379
      %v389 = vunpack.c.l.b16 %v342
      %v390 = vunpack.c.l.b16 %v343
      %v391 = vunpack.c.l.b16 %v344
      %v392 = vunpack.c.l.b16 %v345
      %v393 = vpack.c.b16 %v390, %v389
      %v394 = vpack.c.b16 %v392, %v391
      %vm397 = vcmask 261120
      %v399 = vsel %vm397, %v381, 0
      %v402 = vsel %vm397, %v382, 0
      %v405 = vsel %vm397, %v383, 0
      %v408 = vsel %vm397, %v384, 0
      %410 = vmatpush.bf16.msra.mxu0 0
      %411 = vmatpush.bf16.msra.mxu0 0
      %412 = vmatpush.bf16.msra.mxu0 0
      %413 = vmatpush.bf16.msra.mxu0 0
      %414 = vmatpush.bf16.msra.mxu0 0
      %415 = vmatpush.bf16.msra.mxu0 0
      %416 = vmatpush.bf16.msra.mxu0 %v394
      %417 = vmatpush.bf16.msra.mxu0 %v393
      %418 = vmatmul.bf16.gmra.mxu0 %v399
      %v419 = vpop.f32.mrf.mxu0
      %v420 = vadd.f32 %v363, %v419
      %v421 = vpop.f32.mrf.mxu0
      %v422 = vadd.f32 %v363, %v421
      %423 = vmatmul.bf16.gmra.mxu0 %v402
      %v424 = vpop.f32.mrf.mxu0
      %v425 = vadd.f32 %v363, %v424
      %v426 = vpop.f32.mrf.mxu0
      %v427 = vadd.f32 %v363, %v426
      %428 = vmatmul.bf16.gmra.mxu0 %v405
      %v429 = vpop.f32.mrf.mxu0
      %v430 = vadd.f32 %v363, %v429
      %v431 = vpop.f32.mrf.mxu0
      %v432 = vadd.f32 %v363, %v431
      %433 = vmatmul.bf16.gmra.mxu0 %v408
      %v434 = vpop.f32.mrf.mxu0
      %v435 = vadd.f32 %v363, %v434
      %v436 = vpop.f32.mrf.mxu0
      %v437 = vadd.f32 %v363, %v436
      %438 = vdwg.mxu0
      %v439 = vmul.f32 %v420, 0.35355338
      %v440 = vmul.f32 %v422, 0.35355338
      %v441 = vmul.f32 %v425, 0.35355338
      %v442 = vmul.f32 %v427, 0.35355338
      %v443 = vmul.f32 %v430, 0.35355338
      %v444 = vmul.f32 %v432, 0.35355338
      %v445 = vmul.f32 %v435, 0.35355338
      %v446 = vmul.f32 %v437, 0.35355338
      %v448 = vperm.slane %v359, 0
      %v454 = vunpack.c.l.b16 %v346
      %v455 = vunpack.c.l.b16 %v347
      %v456 = vunpack.c.l.b16 %v348
      %v457 = vunpack.c.l.b16 %v349
      %v458 = vpack.c.b16 %v455, %v454
      %v459 = vpack.c.b16 %v457, %v456
      %462 = vmatpush.bf16.msra.mxu0 0
      %463 = vmatpush.bf16.msra.mxu0 0
      %464 = vmatpush.bf16.msra.mxu0 0
      %465 = vmatpush.bf16.msra.mxu0 0
      %466 = vmatpush.bf16.msra.mxu0 0
      %467 = vmatpush.bf16.msra.mxu0 0
      %468 = vmatpush.bf16.msra.mxu0 %v459
      %469 = vmatpush.bf16.msra.mxu0 %v458
      %470 = vmatmul.bf16.gmra.mxu0 %v399
      %v471 = vpop.f32.mrf.mxu0
      %v472 = vadd.f32 %v448, %v471
      %v473 = vpop.f32.mrf.mxu0
      %v474 = vadd.f32 %v448, %v473
      %475 = vmatmul.bf16.gmra.mxu0 %v402
      %v476 = vpop.f32.mrf.mxu0
      %v477 = vadd.f32 %v448, %v476
      %v478 = vpop.f32.mrf.mxu0
      %v479 = vadd.f32 %v448, %v478
      %480 = vmatmul.bf16.gmra.mxu0 %v405
      %v481 = vpop.f32.mrf.mxu0
      %v482 = vadd.f32 %v448, %v481
      %v483 = vpop.f32.mrf.mxu0
      %v484 = vadd.f32 %v448, %v483
      %485 = vmatmul.bf16.gmra.mxu0 %v408
      %v486 = vpop.f32.mrf.mxu0
      %v487 = vadd.f32 %v448, %v486
      %v488 = vpop.f32.mrf.mxu0
      %v489 = vadd.f32 %v448, %v488
      %490 = vdwg.mxu0
      %v492 = vperm.slane %v360, 0
      %v498 = vunpack.c.l.b16 %v350
      %v499 = vunpack.c.l.b16 %v351
      %v500 = vunpack.c.l.b16 %v352
      %v501 = vunpack.c.l.b16 %v353
      %v502 = vpack.c.b16 %v499, %v498
      %v503 = vpack.c.b16 %v501, %v500
      %506 = vmatpush.bf16.msra.mxu0 0
      %507 = vmatpush.bf16.msra.mxu0 0
      %508 = vmatpush.bf16.msra.mxu0 0
      %509 = vmatpush.bf16.msra.mxu0 0
      %510 = vmatpush.bf16.msra.mxu0 0
      %511 = vmatpush.bf16.msra.mxu0 0
      %512 = vmatpush.bf16.msra.mxu0 %v503
      %513 = vmatpush.bf16.msra.mxu0 %v502
      %514 = vmatmul.bf16.gmra.mxu0 %v399
      %v515 = vpop.f32.mrf.mxu0
      %v516 = vadd.f32 %v492, %v515
      %v517 = vpop.f32.mrf.mxu0
      %v518 = vadd.f32 %v492, %v517
      %519 = vmatmul.bf16.gmra.mxu0 %v402
      %v520 = vpop.f32.mrf.mxu0
      %v521 = vadd.f32 %v492, %v520
      %v522 = vpop.f32.mrf.mxu0
      %v523 = vadd.f32 %v492, %v522
      %524 = vmatmul.bf16.gmra.mxu0 %v405
      %v525 = vpop.f32.mrf.mxu0
      %v526 = vadd.f32 %v492, %v525
      %v527 = vpop.f32.mrf.mxu0
      %v528 = vadd.f32 %v492, %v527
      %529 = vmatmul.bf16.gmra.mxu0 %v408
      %v530 = vpop.f32.mrf.mxu0
      %v531 = vadd.f32 %v492, %v530
      %v532 = vpop.f32.mrf.mxu0
      %v533 = vadd.f32 %v492, %v532
      %534 = vdwg.mxu0
      %v535 = vpack.c.bf16 %v516, %v516
      %v536 = vpack.c.bf16 %v518, %v518
      %v537 = vpack.c.bf16 %v521, %v521
      %v538 = vpack.c.bf16 %v523, %v523
      %v539 = vpack.c.bf16 %v526, %v526
      %v540 = vpack.c.bf16 %v528, %v528
      %v541 = vpack.c.bf16 %v531, %v531
      %v542 = vpack.c.bf16 %v533, %v533
      %v543 = vpack.c.bf16 %v439, %v439
      %v544 = vpack.c.bf16 %v440, %v440
      %v545 = vpack.c.bf16 %v441, %v441
      %v546 = vpack.c.bf16 %v442, %v442
      %v547 = vpack.c.bf16 %v443, %v443
      %v548 = vpack.c.bf16 %v444, %v444
      %v549 = vpack.c.bf16 %v445, %v445
      %v550 = vpack.c.bf16 %v446, %v446
      %v551 = vpack.c.bf16 %v472, %v472
      %v552 = vpack.c.bf16 %v474, %v474
      %v553 = vpack.c.bf16 %v477, %v477
      %v554 = vpack.c.bf16 %v479, %v479
      %v555 = vpack.c.bf16 %v482, %v482
      %v556 = vpack.c.bf16 %v484, %v484
      %v557 = vpack.c.bf16 %v487, %v487
      %v558 = vpack.c.bf16 %v489, %v489
      %v567 = vunpack.c.l.b16 %v543
      %v568 = vunpack.c.l.b16 %v544
      %v569 = vunpack.c.l.b16 %v545
      %v570 = vunpack.c.l.b16 %v546
      %v571 = vunpack.c.l.b16 %v547
      %v572 = vunpack.c.l.b16 %v548
      %v573 = vunpack.c.l.b16 %v549
      %v574 = vunpack.c.l.b16 %v550
      %v575 = vpack.c.b16 %v568, %v567
      %v576 = vpack.c.b16 %v570, %v569
      %v577 = vpack.c.b16 %v572, %v571
      %v578 = vpack.c.b16 %v574, %v573
      %v587 = vunpack.c.l.b16 %v551
      %v588 = vunpack.c.l.b16 %v552
      %v589 = vunpack.c.l.b16 %v553
      %v590 = vunpack.c.l.b16 %v554
      %v591 = vunpack.c.l.b16 %v555
      %v592 = vunpack.c.l.b16 %v556
      %v593 = vunpack.c.l.b16 %v557
      %v594 = vunpack.c.l.b16 %v558
      %v595 = vpack.c.b16 %v588, %v587
      %v596 = vpack.c.b16 %v590, %v589
      %v597 = vpack.c.b16 %v592, %v591
      %v598 = vpack.c.b16 %v594, %v593
      %vm599 = vcmask 64512
      %v601 = vsel %vm599, %v575, 0
      %v604 = vsel %vm599, %v576, 0
      %v607 = vsel %vm599, %v577, 0
      %v610 = vsel %vm599, %v578, 0
      %v613 = vsel %vm599, %v595, 0
      %v616 = vsel %vm599, %v596, 0
      %v619 = vsel %vm599, %v597, 0
      %v622 = vsel %vm599, %v598, 0
      %624 = vmatpush.bf16.xpose.msra.mxu0 0
      %625 = vmatpush.bf16.xpose.msra.mxu0 0
      %626 = vmatpush.bf16.xpose.msra.mxu0 0
      %627 = vmatpush.bf16.xpose.msra.mxu0 0
      %628 = vmatpush.bf16.xpose.msra.mxu0 %v622
      %629 = vmatpush.bf16.xpose.msra.mxu0 %v619
      %630 = vmatpush.bf16.xpose.msra.mxu0 %v616
      %631 = vmatpush.bf16.xpose.msra.mxu0 %v613
      %632 = vmatmul.bf16.gmra.mxu0 %v601
      %v633 = vpop.f32.mrf.mxu0
      %v634 = vadd.f32 0.0, %v633
      %v635 = vpop.f32.mrf.mxu0
      %v636 = vadd.f32 0.0, %v635
      %637 = vmatmul.bf16.gmra.mxu0 %v604
      %v638 = vpop.f32.mrf.mxu0
      %v639 = vadd.f32 0.0, %v638
      %v640 = vpop.f32.mrf.mxu0
      %v641 = vadd.f32 0.0, %v640
      %642 = vmatmul.bf16.gmra.mxu0 %v607
      %v643 = vpop.f32.mrf.mxu0
      %v644 = vadd.f32 0.0, %v643
      %v645 = vpop.f32.mrf.mxu0
      %v646 = vadd.f32 0.0, %v645
      %647 = vmatmul.bf16.gmra.mxu0 %v610
      %v648 = vpop.f32.mrf.mxu0
      %v649 = vadd.f32 0.0, %v648
      %v650 = vpop.f32.mrf.mxu0
      %v651 = vadd.f32 0.0, %v650
      %652 = vdwg.mxu0
      %vm653 = vcmask 523264
      %v654 = vsel %vm653, %v634, -inf
      %655 = vmax.xlane.f32.xlu0 %v654
      %v656 = vpop.xlane.xlu0 %655
      %v657 = vsel %vm653, %v636, -inf
      %658 = vmax.xlane.f32.xlu0 %v657
      %v659 = vpop.xlane.xlu0 %658
      %v660 = vsel %vm653, %v639, -inf
      %661 = vmax.xlane.f32.xlu0 %v660
      %v662 = vpop.xlane.xlu0 %661
      %v663 = vsel %vm653, %v641, -inf
      %664 = vmax.xlane.f32.xlu0 %v663
      %v665 = vpop.xlane.xlu0 %664
      %v666 = vsel %vm653, %v644, -inf
      %667 = vmax.xlane.f32.xlu0 %v666
      %v668 = vpop.xlane.xlu0 %667
      %v669 = vsel %vm653, %v646, -inf
      %670 = vmax.xlane.f32.xlu0 %v669
      %v671 = vpop.xlane.xlu0 %670
      %v672 = vsel %vm653, %v649, -inf
      %673 = vmax.xlane.f32.xlu0 %v672
      %v674 = vpop.xlane.xlu0 %673
      %v675 = vsel %vm653, %v651, -inf
      %676 = vmax.xlane.f32.xlu0 %v675
      %v677 = vpop.xlane.xlu0 %676
      %v678 = vsub.f32 %v634, %v656
      %v679 = vsub.f32 %v636, %v659
      %v680 = vsub.f32 %v639, %v662
      %v681 = vsub.f32 %v641, %v665
      %v682 = vsub.f32 %v644, %v668
      %v683 = vsub.f32 %v646, %v671
      %v684 = vsub.f32 %v649, %v674
      %v685 = vsub.f32 %v651, %v677
      %v686 = vmul.f32 %v678, 1.442695
      %v687 = vpow.pop %v686
      %v688 = vmul.f32 %v679, 1.442695
      %v689 = vpow.pop %v688
      %v690 = vmul.f32 %v680, 1.442695
      %v691 = vpow.pop %v690
      %v692 = vmul.f32 %v681, 1.442695
      %v693 = vpow.pop %v692
      %v694 = vmul.f32 %v682, 1.442695
      %v695 = vpow.pop %v694
      %v696 = vmul.f32 %v683, 1.442695
      %v697 = vpow.pop %v696
      %v698 = vmul.f32 %v684, 1.442695
      %v699 = vpow.pop %v698
      %v700 = vmul.f32 %v685, 1.442695
      %v701 = vpow.pop %v700
      %v702 = vsel %vm653, %v687, 0.0
      %703 = vadd.xlane.f32.xlu0 %v702
      %v704 = vpop.xlane.xlu0 %703
      %v705 = vsel %vm653, %v689, 0.0
      %706 = vadd.xlane.f32.xlu0 %v705
      %v707 = vpop.xlane.xlu0 %706
      %v708 = vsel %vm653, %v691, 0.0
      %709 = vadd.xlane.f32.xlu0 %v708
      %v710 = vpop.xlane.xlu0 %709
      %v711 = vsel %vm653, %v693, 0.0
      %712 = vadd.xlane.f32.xlu0 %v711
      %v713 = vpop.xlane.xlu0 %712
      %v714 = vsel %vm653, %v695, 0.0
      %715 = vadd.xlane.f32.xlu0 %v714
      %v716 = vpop.xlane.xlu0 %715
      %v717 = vsel %vm653, %v697, 0.0
      %718 = vadd.xlane.f32.xlu0 %v717
      %v719 = vpop.xlane.xlu0 %718
      %v720 = vsel %vm653, %v699, 0.0
      %721 = vadd.xlane.f32.xlu0 %v720
      %v722 = vpop.xlane.xlu0 %721
      %v723 = vsel %vm653, %v701, 0.0
      %724 = vadd.xlane.f32.xlu0 %v723
      %v725 = vpop.xlane.xlu0 %724
      %v726 = vrcp.pop %v704
      %v727 = vrcp.pop %v707
      %v728 = vrcp.pop %v710
      %v729 = vrcp.pop %v713
      %v730 = vrcp.pop %v716
      %v731 = vrcp.pop %v719
      %v732 = vrcp.pop %v722
      %v733 = vrcp.pop %v725
      %v734 = vmul.f32 %v687, %v726
      %v735 = vmul.f32 %v689, %v727
      %v736 = vmul.f32 %v691, %v728
      %v737 = vmul.f32 %v693, %v729
      %v738 = vmul.f32 %v695, %v730
      %v739 = vmul.f32 %v697, %v731
      %v740 = vmul.f32 %v699, %v732
      %v741 = vmul.f32 %v701, %v733
      %v742 = vpack.c.bf16 %v735, %v734
      %v743 = vpack.c.bf16 %v737, %v736
      %v744 = vpack.c.bf16 %v739, %v738
      %v745 = vpack.c.bf16 %v741, %v740
      %v754 = vunpack.c.l.b16 %v535
      %v755 = vunpack.c.l.b16 %v536
      %v756 = vunpack.c.l.b16 %v537
      %v757 = vunpack.c.l.b16 %v538
      %v758 = vunpack.c.l.b16 %v539
      %v759 = vunpack.c.l.b16 %v540
      %v760 = vunpack.c.l.b16 %v541
      %v761 = vunpack.c.l.b16 %v542
      %v762 = vpack.c.b16 %v755, %v754
      %v763 = vpack.c.b16 %v757, %v756
      %v764 = vpack.c.b16 %v759, %v758
      %v765 = vpack.c.b16 %v761, %v760
      %v771 = vsel %vm653, %v742, 0
      %v774 = vsel %vm653, %v743, 0
      %v777 = vsel %vm653, %v744, 0
      %v780 = vsel %vm653, %v745, 0
      %782 = vmatpush.bf16.msra.mxu0 0
      %783 = vmatpush.bf16.msra.mxu0 0
      %784 = vmatpush.bf16.msra.mxu0 0
      %785 = vmatpush.bf16.msra.mxu0 0
      %786 = vmatpush.bf16.msra.mxu0 %v765
      %787 = vmatpush.bf16.msra.mxu0 %v764
      %788 = vmatpush.bf16.msra.mxu0 %v763
      %789 = vmatpush.bf16.msra.mxu0 %v762
      %790 = vmatmul.bf16.gmra.mxu0 %v771
      %v791 = vpop.f32.mrf.mxu0
      %v792 = vadd.f32 0.0, %v791
      %v793 = vpop.f32.mrf.mxu0
      %v794 = vadd.f32 0.0, %v793
      %795 = vmatmul.bf16.gmra.mxu0 %v774
      %v796 = vpop.f32.mrf.mxu0
      %v797 = vadd.f32 0.0, %v796
      %v798 = vpop.f32.mrf.mxu0
      %v799 = vadd.f32 0.0, %v798
      %800 = vmatmul.bf16.gmra.mxu0 %v777
      %v801 = vpop.f32.mrf.mxu0
      %v802 = vadd.f32 0.0, %v801
      %v803 = vpop.f32.mrf.mxu0
      %v804 = vadd.f32 0.0, %v803
      %805 = vmatmul.bf16.gmra.mxu0 %v780
      %v806 = vpop.f32.mrf.mxu0
      %v807 = vadd.f32 0.0, %v806
      %v808 = vpop.f32.mrf.mxu0
      %v809 = vadd.f32 0.0, %v808
      %810 = vdwg.mxu0
      %v811 = vpack.c.bf16 %v794, %v792
      %v812 = vpack.c.bf16 %v799, %v797
      %v813 = vpack.c.bf16 %v804, %v802
      %v814 = vpack.c.bf16 %v809, %v807
      %815 = vrot.lane.b32.xlu0 %v575, 120
      %v816 = vpop.permute.xlu0 %815
      %817 = vrot.lane.b32.xlu0 %v576, 120
      %v818 = vpop.permute.xlu0 %817
      %819 = vrot.lane.b32.xlu0 %v577, 120
      %v820 = vpop.permute.xlu0 %819
      %821 = vrot.lane.b32.xlu0 %v578, 120
      %v822 = vpop.permute.xlu0 %821
      %823 = vrot.lane.b32.xlu0 %v595, 120
      %v824 = vpop.permute.xlu0 %823
      %825 = vrot.lane.b32.xlu0 %v596, 120
      %v826 = vpop.permute.xlu0 %825
      %827 = vrot.lane.b32.xlu0 %v597, 120
      %v828 = vpop.permute.xlu0 %827
      %829 = vrot.lane.b32.xlu0 %v598, 120
      %v830 = vpop.permute.xlu0 %829
      %v832 = vsel %vm599, %v816, 0
      %v835 = vsel %vm599, %v818, 0
      %v838 = vsel %vm599, %v820, 0
      %v841 = vsel %vm599, %v822, 0
      %v844 = vsel %vm599, %v824, 0
      %v847 = vsel %vm599, %v826, 0
      %v850 = vsel %vm599, %v828, 0
      %v853 = vsel %vm599, %v830, 0
      %855 = vmatpush.bf16.xpose.msra.mxu0 0
      %856 = vmatpush.bf16.xpose.msra.mxu0 0
      %857 = vmatpush.bf16.xpose.msra.mxu0 0
      %858 = vmatpush.bf16.xpose.msra.mxu0 0
      %859 = vmatpush.bf16.xpose.msra.mxu0 %v853
      %860 = vmatpush.bf16.xpose.msra.mxu0 %v850
      %861 = vmatpush.bf16.xpose.msra.mxu0 %v847
      %862 = vmatpush.bf16.xpose.msra.mxu0 %v844
      %863 = vmatmul.bf16.gmra.mxu0 %v832
      %v864 = vpop.f32.mrf.mxu0
      %v865 = vadd.f32 0.0, %v864
      %v866 = vpop.f32.mrf.mxu0
      %v867 = vadd.f32 0.0, %v866
      %868 = vmatmul.bf16.gmra.mxu0 %v835
      %v869 = vpop.f32.mrf.mxu0
      %v870 = vadd.f32 0.0, %v869
      %v871 = vpop.f32.mrf.mxu0
      %v872 = vadd.f32 0.0, %v871
      %873 = vmatmul.bf16.gmra.mxu0 %v838
      %v874 = vpop.f32.mrf.mxu0
      %v875 = vadd.f32 0.0, %v874
      %v876 = vpop.f32.mrf.mxu0
      %v877 = vadd.f32 0.0, %v876
      %878 = vmatmul.bf16.gmra.mxu0 %v841
      %v879 = vpop.f32.mrf.mxu0
      %v880 = vadd.f32 0.0, %v879
      %v881 = vpop.f32.mrf.mxu0
      %v882 = vadd.f32 0.0, %v881
      %883 = vdwg.mxu0
      %v884 = vsel %vm653, %v865, -inf
      %885 = vmax.xlane.f32.xlu0 %v884
      %v886 = vpop.xlane.xlu0 %885
      %v887 = vsel %vm653, %v867, -inf
      %888 = vmax.xlane.f32.xlu0 %v887
      %v889 = vpop.xlane.xlu0 %888
      %v890 = vsel %vm653, %v870, -inf
      %891 = vmax.xlane.f32.xlu0 %v890
      %v892 = vpop.xlane.xlu0 %891
      %v893 = vsel %vm653, %v872, -inf
      %894 = vmax.xlane.f32.xlu0 %v893
      %v895 = vpop.xlane.xlu0 %894
      %v896 = vsel %vm653, %v875, -inf
      %897 = vmax.xlane.f32.xlu0 %v896
      %v898 = vpop.xlane.xlu0 %897
      %v899 = vsel %vm653, %v877, -inf
      %900 = vmax.xlane.f32.xlu0 %v899
      %v901 = vpop.xlane.xlu0 %900
      %v902 = vsel %vm653, %v880, -inf
      %903 = vmax.xlane.f32.xlu0 %v902
      %v904 = vpop.xlane.xlu0 %903
      %v905 = vsel %vm653, %v882, -inf
      %906 = vmax.xlane.f32.xlu0 %v905
      %v907 = vpop.xlane.xlu0 %906
      %v908 = vsub.f32 %v865, %v886
      %v909 = vsub.f32 %v867, %v889
      %v910 = vsub.f32 %v870, %v892
      %v911 = vsub.f32 %v872, %v895
      %v912 = vsub.f32 %v875, %v898
      %v913 = vsub.f32 %v877, %v901
      %v914 = vsub.f32 %v880, %v904
      %v915 = vsub.f32 %v882, %v907
      %v916 = vmul.f32 %v908, 1.442695
      %v917 = vpow.pop %v916
      %v918 = vmul.f32 %v909, 1.442695
      %v919 = vpow.pop %v918
      %v920 = vmul.f32 %v910, 1.442695
      %v921 = vpow.pop %v920
      %v922 = vmul.f32 %v911, 1.442695
      %v923 = vpow.pop %v922
      %v924 = vmul.f32 %v912, 1.442695
      %v925 = vpow.pop %v924
      %v926 = vmul.f32 %v913, 1.442695
      %v927 = vpow.pop %v926
      %v928 = vmul.f32 %v914, 1.442695
      %v929 = vpow.pop %v928
      %v930 = vmul.f32 %v915, 1.442695
      %v931 = vpow.pop %v930
      %v932 = vsel %vm653, %v917, 0.0
      %933 = vadd.xlane.f32.xlu0 %v932
      %v934 = vpop.xlane.xlu0 %933
      %v935 = vsel %vm653, %v919, 0.0
      %936 = vadd.xlane.f32.xlu0 %v935
      %v937 = vpop.xlane.xlu0 %936
      %v938 = vsel %vm653, %v921, 0.0
      %939 = vadd.xlane.f32.xlu0 %v938
      %v940 = vpop.xlane.xlu0 %939
      %v941 = vsel %vm653, %v923, 0.0
      %942 = vadd.xlane.f32.xlu0 %v941
      %v943 = vpop.xlane.xlu0 %942
      %v944 = vsel %vm653, %v925, 0.0
      %945 = vadd.xlane.f32.xlu0 %v944
      %v946 = vpop.xlane.xlu0 %945
      %v947 = vsel %vm653, %v927, 0.0
      %948 = vadd.xlane.f32.xlu0 %v947
      %v949 = vpop.xlane.xlu0 %948
      %v950 = vsel %vm653, %v929, 0.0
      %951 = vadd.xlane.f32.xlu0 %v950
      %v952 = vpop.xlane.xlu0 %951
      %v953 = vsel %vm653, %v931, 0.0
      %954 = vadd.xlane.f32.xlu0 %v953
      %v955 = vpop.xlane.xlu0 %954
      %v956 = vrcp.pop %v934
      %v957 = vrcp.pop %v937
      %v958 = vrcp.pop %v940
      %v959 = vrcp.pop %v943
      %v960 = vrcp.pop %v946
      %v961 = vrcp.pop %v949
      %v962 = vrcp.pop %v952
      %v963 = vrcp.pop %v955
      %v964 = vmul.f32 %v917, %v956
      %v965 = vmul.f32 %v919, %v957
      %v966 = vmul.f32 %v921, %v958
      %v967 = vmul.f32 %v923, %v959
      %v968 = vmul.f32 %v925, %v960
      %v969 = vmul.f32 %v927, %v961
      %v970 = vmul.f32 %v929, %v962
      %v971 = vmul.f32 %v931, %v963
      %v972 = vpack.c.bf16 %v965, %v964
      %v973 = vpack.c.bf16 %v967, %v966
      %v974 = vpack.c.bf16 %v969, %v968
      %v975 = vpack.c.bf16 %v971, %v970
      %976 = vrot.lane.b32.xlu0 %v762, 120
      %v977 = vpop.permute.xlu0 %976
      %978 = vrot.lane.b32.xlu0 %v763, 120
      %v979 = vpop.permute.xlu0 %978
      %980 = vrot.lane.b32.xlu0 %v764, 120
      %v981 = vpop.permute.xlu0 %980
      %982 = vrot.lane.b32.xlu0 %v765, 120
      %v983 = vpop.permute.xlu0 %982
      %v989 = vsel %vm653, %v972, 0
      %v992 = vsel %vm653, %v973, 0
      %v995 = vsel %vm653, %v974, 0
      %v998 = vsel %vm653, %v975, 0
      %1000 = vmatpush.bf16.msra.mxu0 0
      %1001 = vmatpush.bf16.msra.mxu0 0
      %1002 = vmatpush.bf16.msra.mxu0 0
      %1003 = vmatpush.bf16.msra.mxu0 0
      %1004 = vmatpush.bf16.msra.mxu0 %v983
      %1005 = vmatpush.bf16.msra.mxu0 %v981
      %1006 = vmatpush.bf16.msra.mxu0 %v979
      %1007 = vmatpush.bf16.msra.mxu0 %v977
      %1008 = vmatmul.bf16.gmra.mxu0 %v989
      %v1009 = vpop.f32.mrf.mxu0
      %v1010 = vadd.f32 0.0, %v1009
      %v1011 = vpop.f32.mrf.mxu0
      %v1012 = vadd.f32 0.0, %v1011
      %1013 = vmatmul.bf16.gmra.mxu0 %v992
      %v1014 = vpop.f32.mrf.mxu0
      %v1015 = vadd.f32 0.0, %v1014
      %v1016 = vpop.f32.mrf.mxu0
      %v1017 = vadd.f32 0.0, %v1016
      %1018 = vmatmul.bf16.gmra.mxu0 %v995
      %v1019 = vpop.f32.mrf.mxu0
      %v1020 = vadd.f32 0.0, %v1019
      %v1021 = vpop.f32.mrf.mxu0
      %v1022 = vadd.f32 0.0, %v1021
      %1023 = vmatmul.bf16.gmra.mxu0 %v998
      %v1024 = vpop.f32.mrf.mxu0
      %v1025 = vadd.f32 0.0, %v1024
      %v1026 = vpop.f32.mrf.mxu0
      %v1027 = vadd.f32 0.0, %v1026
      %1028 = vdwg.mxu0
      %v1029 = vpack.c.bf16 %v1012, %v1010
      %v1030 = vpack.c.bf16 %v1017, %v1015
      %v1031 = vpack.c.bf16 %v1022, %v1020
      %v1032 = vpack.c.bf16 %v1027, %v1025
      %v1034 = vsel %vm599, %v1029, 0
      %v1037 = vsel %vm599, %v1030, 0
      %v1040 = vsel %vm599, %v1031, 0
      %v1043 = vsel %vm599, %v1032, 0
      %vm1045 = vcmask 1043456
      %v1047 = vsel %vm1045, %v355, 0
      %1049 = vmatpush.bf16.msra.mxu0 0
      %1050 = vmatpush.bf16.msra.mxu0 0
      %1051 = vmatpush.bf16.msra.mxu0 0
      %1052 = vmatpush.bf16.msra.mxu0 0
      %1053 = vmatpush.bf16.msra.mxu0 0
      %1054 = vmatpush.bf16.msra.mxu0 0
      %1055 = vmatpush.bf16.msra.mxu0 0
      %1056 = vmatpush.bf16.msra.mxu0 %v1047
      %1057 = vmatmul.bf16.gmra.mxu0 %v1034
      %v1058 = vpop.f32.mrf.mxu0
      %v1059 = vadd.f32 0.0, %v1058
      %v1060 = vpop.f32.mrf.mxu0
      %v1061 = vadd.f32 0.0, %v1060
      %1062 = vmatmul.bf16.gmra.mxu0 %v1037
      %v1063 = vpop.f32.mrf.mxu0
      %v1064 = vadd.f32 0.0, %v1063
      %v1065 = vpop.f32.mrf.mxu0
      %v1066 = vadd.f32 0.0, %v1065
      %1067 = vmatmul.bf16.gmra.mxu0 %v1040
      %v1068 = vpop.f32.mrf.mxu0
      %v1069 = vadd.f32 0.0, %v1068
      %v1070 = vpop.f32.mrf.mxu0
      %v1071 = vadd.f32 0.0, %v1070
      %1072 = vmatmul.bf16.gmra.mxu0 %v1043
      %v1073 = vpop.f32.mrf.mxu0
      %v1074 = vadd.f32 0.0, %v1073
      %v1075 = vpop.f32.mrf.mxu0
      %v1076 = vadd.f32 0.0, %v1075
      %1077 = vdwg.mxu0
      %v1079 = vsel %vm599, %v811, 0
      %v1082 = vsel %vm599, %v812, 0
      %v1085 = vsel %vm599, %v813, 0
      %v1088 = vsel %vm599, %v814, 0
      %v1091 = vsel %vm1045, %v354, 0
      %1093 = vmatpush.bf16.msra.mxu0 0
      %1094 = vmatpush.bf16.msra.mxu0 0
      %1095 = vmatpush.bf16.msra.mxu0 0
      %1096 = vmatpush.bf16.msra.mxu0 0
      %1097 = vmatpush.bf16.msra.mxu0 0
      %1098 = vmatpush.bf16.msra.mxu0 0
      %1099 = vmatpush.bf16.msra.mxu0 0
      %1100 = vmatpush.bf16.msra.mxu0 %v1091
      %1101 = vmatmul.bf16.gmra.mxu0 %v1079
      %v1102 = vpop.f32.mrf.mxu0
      %v1103 = vadd.f32 %v1059, %v1102
      %v1104 = vpop.f32.mrf.mxu0
      %v1105 = vadd.f32 %v1061, %v1104
      %1106 = vmatmul.bf16.gmra.mxu0 %v1082
      %v1107 = vpop.f32.mrf.mxu0
      %v1108 = vadd.f32 %v1064, %v1107
      %v1109 = vpop.f32.mrf.mxu0
      %v1110 = vadd.f32 %v1066, %v1109
      %1111 = vmatmul.bf16.gmra.mxu0 %v1085
      %v1112 = vpop.f32.mrf.mxu0
      %v1113 = vadd.f32 %v1069, %v1112
      %v1114 = vpop.f32.mrf.mxu0
      %v1115 = vadd.f32 %v1071, %v1114
      %1116 = vmatmul.bf16.gmra.mxu0 %v1088
      %v1117 = vpop.f32.mrf.mxu0
      %v1118 = vadd.f32 %v1074, %v1117
      %v1119 = vpop.f32.mrf.mxu0
      %v1120 = vadd.f32 %v1076, %v1119
      %1121 = vdwg.mxu0
      %1122 = vrot.lane.b32.xlu0 %v575, 112
      %v1123 = vpop.permute.xlu0 %1122
      %1124 = vrot.lane.b32.xlu0 %v576, 112
      %v1125 = vpop.permute.xlu0 %1124
      %1126 = vrot.lane.b32.xlu0 %v577, 112
      %v1127 = vpop.permute.xlu0 %1126
      %1128 = vrot.lane.b32.xlu0 %v578, 112
      %v1129 = vpop.permute.xlu0 %1128
      %1130 = vrot.lane.b32.xlu0 %v595, 112
      %v1131 = vpop.permute.xlu0 %1130
      %1132 = vrot.lane.b32.xlu0 %v596, 112
      %v1133 = vpop.permute.xlu0 %1132
      %1134 = vrot.lane.b32.xlu0 %v597, 112
      %v1135 = vpop.permute.xlu0 %1134
      %1136 = vrot.lane.b32.xlu0 %v598, 112
      %v1137 = vpop.permute.xlu0 %1136
      %v1139 = vsel %vm599, %v1123, 0
      %v1142 = vsel %vm599, %v1125, 0
      %v1145 = vsel %vm599, %v1127, 0
      %v1148 = vsel %vm599, %v1129, 0
      %v1151 = vsel %vm599, %v1131, 0
      %v1154 = vsel %vm599, %v1133, 0
      %v1157 = vsel %vm599, %v1135, 0
      %v1160 = vsel %vm599, %v1137, 0
      %1162 = vmatpush.bf16.xpose.msra.mxu0 0
      %1163 = vmatpush.bf16.xpose.msra.mxu0 0
      %1164 = vmatpush.bf16.xpose.msra.mxu0 0
      %1165 = vmatpush.bf16.xpose.msra.mxu0 0
      %1166 = vmatpush.bf16.xpose.msra.mxu0 %v1160
      %1167 = vmatpush.bf16.xpose.msra.mxu0 %v1157
      %1168 = vmatpush.bf16.xpose.msra.mxu0 %v1154
      %1169 = vmatpush.bf16.xpose.msra.mxu0 %v1151
      %1170 = vmatmul.bf16.gmra.mxu0 %v1139
      %v1171 = vpop.f32.mrf.mxu0
      %v1172 = vadd.f32 0.0, %v1171
      %v1173 = vpop.f32.mrf.mxu0
      %v1174 = vadd.f32 0.0, %v1173
      %1175 = vmatmul.bf16.gmra.mxu0 %v1142
      %v1176 = vpop.f32.mrf.mxu0
      %v1177 = vadd.f32 0.0, %v1176
      %v1178 = vpop.f32.mrf.mxu0
      %v1179 = vadd.f32 0.0, %v1178
      %1180 = vmatmul.bf16.gmra.mxu0 %v1145
      %v1181 = vpop.f32.mrf.mxu0
      %v1182 = vadd.f32 0.0, %v1181
      %v1183 = vpop.f32.mrf.mxu0
      %v1184 = vadd.f32 0.0, %v1183
      %1185 = vmatmul.bf16.gmra.mxu0 %v1148
      %v1186 = vpop.f32.mrf.mxu0
      %v1187 = vadd.f32 0.0, %v1186
      %v1188 = vpop.f32.mrf.mxu0
      %v1189 = vadd.f32 0.0, %v1188
      %1190 = vdwg.mxu0
      %v1191 = vsel %vm653, %v1172, -inf
      %1192 = vmax.xlane.f32.xlu0 %v1191
      %v1193 = vpop.xlane.xlu0 %1192
      %v1194 = vsel %vm653, %v1174, -inf
      %1195 = vmax.xlane.f32.xlu0 %v1194
      %v1196 = vpop.xlane.xlu0 %1195
      %v1197 = vsel %vm653, %v1177, -inf
      %1198 = vmax.xlane.f32.xlu0 %v1197
      %v1199 = vpop.xlane.xlu0 %1198
      %v1200 = vsel %vm653, %v1179, -inf
      %1201 = vmax.xlane.f32.xlu0 %v1200
      %v1202 = vpop.xlane.xlu0 %1201
      %v1203 = vsel %vm653, %v1182, -inf
      %1204 = vmax.xlane.f32.xlu0 %v1203
      %v1205 = vpop.xlane.xlu0 %1204
      %v1206 = vsel %vm653, %v1184, -inf
      %1207 = vmax.xlane.f32.xlu0 %v1206
      %v1208 = vpop.xlane.xlu0 %1207
      %v1209 = vsel %vm653, %v1187, -inf
      %1210 = vmax.xlane.f32.xlu0 %v1209
      %v1211 = vpop.xlane.xlu0 %1210
      %v1212 = vsel %vm653, %v1189, -inf
      %1213 = vmax.xlane.f32.xlu0 %v1212
      %v1214 = vpop.xlane.xlu0 %1213
      %v1215 = vsub.f32 %v1172, %v1193
      %v1216 = vsub.f32 %v1174, %v1196
      %v1217 = vsub.f32 %v1177, %v1199
      %v1218 = vsub.f32 %v1179, %v1202
      %v1219 = vsub.f32 %v1182, %v1205
      %v1220 = vsub.f32 %v1184, %v1208
      %v1221 = vsub.f32 %v1187, %v1211
      %v1222 = vsub.f32 %v1189, %v1214
      %v1223 = vmul.f32 %v1215, 1.442695
      %v1224 = vpow.pop %v1223
      %v1225 = vmul.f32 %v1216, 1.442695
      %v1226 = vpow.pop %v1225
      %v1227 = vmul.f32 %v1217, 1.442695
      %v1228 = vpow.pop %v1227
      %v1229 = vmul.f32 %v1218, 1.442695
      %v1230 = vpow.pop %v1229
      %v1231 = vmul.f32 %v1219, 1.442695
      %v1232 = vpow.pop %v1231
      %v1233 = vmul.f32 %v1220, 1.442695
      %v1234 = vpow.pop %v1233
      %v1235 = vmul.f32 %v1221, 1.442695
      %v1236 = vpow.pop %v1235
      %v1237 = vmul.f32 %v1222, 1.442695
      %v1238 = vpow.pop %v1237
      %v1239 = vsel %vm653, %v1224, 0.0
      %1240 = vadd.xlane.f32.xlu0 %v1239
      %v1241 = vpop.xlane.xlu0 %1240
      %v1242 = vsel %vm653, %v1226, 0.0
      %1243 = vadd.xlane.f32.xlu0 %v1242
      %v1244 = vpop.xlane.xlu0 %1243
      %v1245 = vsel %vm653, %v1228, 0.0
      %1246 = vadd.xlane.f32.xlu0 %v1245
      %v1247 = vpop.xlane.xlu0 %1246
      %v1248 = vsel %vm653, %v1230, 0.0
      %1249 = vadd.xlane.f32.xlu0 %v1248
      %v1250 = vpop.xlane.xlu0 %1249
      %v1251 = vsel %vm653, %v1232, 0.0
      %1252 = vadd.xlane.f32.xlu0 %v1251
      %v1253 = vpop.xlane.xlu0 %1252
      %v1254 = vsel %vm653, %v1234, 0.0
      %1255 = vadd.xlane.f32.xlu0 %v1254
      %v1256 = vpop.xlane.xlu0 %1255
      %v1257 = vsel %vm653, %v1236, 0.0
      %1258 = vadd.xlane.f32.xlu0 %v1257
      %v1259 = vpop.xlane.xlu0 %1258
      %v1260 = vsel %vm653, %v1238, 0.0
      %1261 = vadd.xlane.f32.xlu0 %v1260
      %v1262 = vpop.xlane.xlu0 %1261
      %v1263 = vrcp.pop %v1241
      %v1264 = vrcp.pop %v1244
      %v1265 = vrcp.pop %v1247
      %v1266 = vrcp.pop %v1250
      %v1267 = vrcp.pop %v1253
      %v1268 = vrcp.pop %v1256
      %v1269 = vrcp.pop %v1259
      %v1270 = vrcp.pop %v1262
      %v1271 = vmul.f32 %v1224, %v1263
      %v1272 = vmul.f32 %v1226, %v1264
      %v1273 = vmul.f32 %v1228, %v1265
      %v1274 = vmul.f32 %v1230, %v1266
      %v1275 = vmul.f32 %v1232, %v1267
      %v1276 = vmul.f32 %v1234, %v1268
      %v1277 = vmul.f32 %v1236, %v1269
      %v1278 = vmul.f32 %v1238, %v1270
      %v1279 = vpack.c.bf16 %v1272, %v1271
      %v1280 = vpack.c.bf16 %v1274, %v1273
      %v1281 = vpack.c.bf16 %v1276, %v1275
      %v1282 = vpack.c.bf16 %v1278, %v1277
      %1283 = vrot.lane.b32.xlu0 %v762, 112
      %v1284 = vpop.permute.xlu0 %1283
      %1285 = vrot.lane.b32.xlu0 %v763, 112
      %v1286 = vpop.permute.xlu0 %1285
      %1287 = vrot.lane.b32.xlu0 %v764, 112
      %v1288 = vpop.permute.xlu0 %1287
      %1289 = vrot.lane.b32.xlu0 %v765, 112
      %v1290 = vpop.permute.xlu0 %1289
      %v1296 = vsel %vm653, %v1279, 0
      %v1299 = vsel %vm653, %v1280, 0
      %v1302 = vsel %vm653, %v1281, 0
      %v1305 = vsel %vm653, %v1282, 0
      %1307 = vmatpush.bf16.msra.mxu0 0
      %1308 = vmatpush.bf16.msra.mxu0 0
      %1309 = vmatpush.bf16.msra.mxu0 0
      %1310 = vmatpush.bf16.msra.mxu0 0
      %1311 = vmatpush.bf16.msra.mxu0 %v1290
      %1312 = vmatpush.bf16.msra.mxu0 %v1288
      %1313 = vmatpush.bf16.msra.mxu0 %v1286
      %1314 = vmatpush.bf16.msra.mxu0 %v1284
      %1315 = vmatmul.bf16.gmra.mxu0 %v1296
      %v1316 = vpop.f32.mrf.mxu0
      %v1317 = vadd.f32 0.0, %v1316
      %v1318 = vpop.f32.mrf.mxu0
      %v1319 = vadd.f32 0.0, %v1318
      %1320 = vmatmul.bf16.gmra.mxu0 %v1299
      %v1321 = vpop.f32.mrf.mxu0
      %v1322 = vadd.f32 0.0, %v1321
      %v1323 = vpop.f32.mrf.mxu0
      %v1324 = vadd.f32 0.0, %v1323
      %1325 = vmatmul.bf16.gmra.mxu0 %v1302
      %v1326 = vpop.f32.mrf.mxu0
      %v1327 = vadd.f32 0.0, %v1326
      %v1328 = vpop.f32.mrf.mxu0
      %v1329 = vadd.f32 0.0, %v1328
      %1330 = vmatmul.bf16.gmra.mxu0 %v1305
      %v1331 = vpop.f32.mrf.mxu0
      %v1332 = vadd.f32 0.0, %v1331
      %v1333 = vpop.f32.mrf.mxu0
      %v1334 = vadd.f32 0.0, %v1333
      %1335 = vdwg.mxu0
      %v1336 = vpack.c.bf16 %v1319, %v1317
      %v1337 = vpack.c.bf16 %v1324, %v1322
      %v1338 = vpack.c.bf16 %v1329, %v1327
      %v1339 = vpack.c.bf16 %v1334, %v1332
      %v1341 = vsel %vm599, %v1336, 0
      %v1344 = vsel %vm599, %v1337, 0
      %v1347 = vsel %vm599, %v1338, 0
      %v1350 = vsel %vm599, %v1339, 0
      %v1353 = vsel %vm1045, %v356, 0
      %1355 = vmatpush.bf16.msra.mxu0 0
      %1356 = vmatpush.bf16.msra.mxu0 0
      %1357 = vmatpush.bf16.msra.mxu0 0
      %1358 = vmatpush.bf16.msra.mxu0 0
      %1359 = vmatpush.bf16.msra.mxu0 0
      %1360 = vmatpush.bf16.msra.mxu0 0
      %1361 = vmatpush.bf16.msra.mxu0 0
      %1362 = vmatpush.bf16.msra.mxu0 %v1353
      %1363 = vmatmul.bf16.gmra.mxu0 %v1341
      %v1364 = vpop.f32.mrf.mxu0
      %v1365 = vadd.f32 0.0, %v1364
      %v1366 = vpop.f32.mrf.mxu0
      %v1367 = vadd.f32 0.0, %v1366
      %1368 = vmatmul.bf16.gmra.mxu0 %v1344
      %v1369 = vpop.f32.mrf.mxu0
      %v1370 = vadd.f32 0.0, %v1369
      %v1371 = vpop.f32.mrf.mxu0
      %v1372 = vadd.f32 0.0, %v1371
      %1373 = vmatmul.bf16.gmra.mxu0 %v1347
      %v1374 = vpop.f32.mrf.mxu0
      %v1375 = vadd.f32 0.0, %v1374
      %v1376 = vpop.f32.mrf.mxu0
      %v1377 = vadd.f32 0.0, %v1376
      %1378 = vmatmul.bf16.gmra.mxu0 %v1350
      %v1379 = vpop.f32.mrf.mxu0
      %v1380 = vadd.f32 0.0, %v1379
      %v1381 = vpop.f32.mrf.mxu0
      %v1382 = vadd.f32 0.0, %v1381
      %1383 = vdwg.mxu0
      %v1384 = vadd.f32 %v1103, %v1365
      %v1385 = vadd.f32 %v1105, %v1367
      %v1386 = vadd.f32 %v1108, %v1370
      %v1387 = vadd.f32 %v1110, %v1372
      %v1388 = vadd.f32 %v1113, %v1375
      %v1389 = vadd.f32 %v1115, %v1377
      %v1390 = vadd.f32 %v1118, %v1380
      %v1391 = vadd.f32 %v1120, %v1382
      %1392 = vrot.lane.b32.xlu0 %v575, 104
      %v1393 = vpop.permute.xlu0 %1392
      %1394 = vrot.lane.b32.xlu0 %v576, 104
      %v1395 = vpop.permute.xlu0 %1394
      %1396 = vrot.lane.b32.xlu0 %v577, 104
      %v1397 = vpop.permute.xlu0 %1396
      %1398 = vrot.lane.b32.xlu0 %v578, 104
      %v1399 = vpop.permute.xlu0 %1398
      %1400 = vrot.lane.b32.xlu0 %v595, 104
      %v1401 = vpop.permute.xlu0 %1400
      %1402 = vrot.lane.b32.xlu0 %v596, 104
      %v1403 = vpop.permute.xlu0 %1402
      %1404 = vrot.lane.b32.xlu0 %v597, 104
      %v1405 = vpop.permute.xlu0 %1404
      %1406 = vrot.lane.b32.xlu0 %v598, 104
      %v1407 = vpop.permute.xlu0 %1406
      %v1409 = vsel %vm599, %v1393, 0
      %v1412 = vsel %vm599, %v1395, 0
      %v1415 = vsel %vm599, %v1397, 0
      %v1418 = vsel %vm599, %v1399, 0
      %v1421 = vsel %vm599, %v1401, 0
      %v1424 = vsel %vm599, %v1403, 0
      %v1427 = vsel %vm599, %v1405, 0
      %v1430 = vsel %vm599, %v1407, 0
      %1432 = vmatpush.bf16.xpose.msra.mxu0 0
      %1433 = vmatpush.bf16.xpose.msra.mxu0 0
      %1434 = vmatpush.bf16.xpose.msra.mxu0 0
      %1435 = vmatpush.bf16.xpose.msra.mxu0 0
      %1436 = vmatpush.bf16.xpose.msra.mxu0 %v1430
      %1437 = vmatpush.bf16.xpose.msra.mxu0 %v1427
      %1438 = vmatpush.bf16.xpose.msra.mxu0 %v1424
      %1439 = vmatpush.bf16.xpose.msra.mxu0 %v1421
      %1440 = vmatmul.bf16.gmra.mxu0 %v1409
      %v1441 = vpop.f32.mrf.mxu0
      %v1442 = vadd.f32 0.0, %v1441
      %v1443 = vpop.f32.mrf.mxu0
      %v1444 = vadd.f32 0.0, %v1443
      %1445 = vmatmul.bf16.gmra.mxu0 %v1412
      %v1446 = vpop.f32.mrf.mxu0
      %v1447 = vadd.f32 0.0, %v1446
      %v1448 = vpop.f32.mrf.mxu0
      %v1449 = vadd.f32 0.0, %v1448
      %1450 = vmatmul.bf16.gmra.mxu0 %v1415
      %v1451 = vpop.f32.mrf.mxu0
      %v1452 = vadd.f32 0.0, %v1451
      %v1453 = vpop.f32.mrf.mxu0
      %v1454 = vadd.f32 0.0, %v1453
      %1455 = vmatmul.bf16.gmra.mxu0 %v1418
      %v1456 = vpop.f32.mrf.mxu0
      %v1457 = vadd.f32 0.0, %v1456
      %v1458 = vpop.f32.mrf.mxu0
      %v1459 = vadd.f32 0.0, %v1458
      %1460 = vdwg.mxu0
      %v1461 = vsel %vm653, %v1442, -inf
      %1462 = vmax.xlane.f32.xlu0 %v1461
      %v1463 = vpop.xlane.xlu0 %1462
      %v1464 = vsel %vm653, %v1444, -inf
      %1465 = vmax.xlane.f32.xlu0 %v1464
      %v1466 = vpop.xlane.xlu0 %1465
      %v1467 = vsel %vm653, %v1447, -inf
      %1468 = vmax.xlane.f32.xlu0 %v1467
      %v1469 = vpop.xlane.xlu0 %1468
      %v1470 = vsel %vm653, %v1449, -inf
      %1471 = vmax.xlane.f32.xlu0 %v1470
      %v1472 = vpop.xlane.xlu0 %1471
      %v1473 = vsel %vm653, %v1452, -inf
      %1474 = vmax.xlane.f32.xlu0 %v1473
      %v1475 = vpop.xlane.xlu0 %1474
      %v1476 = vsel %vm653, %v1454, -inf
      %1477 = vmax.xlane.f32.xlu0 %v1476
      %v1478 = vpop.xlane.xlu0 %1477
      %v1479 = vsel %vm653, %v1457, -inf
      %1480 = vmax.xlane.f32.xlu0 %v1479
      %v1481 = vpop.xlane.xlu0 %1480
      %v1482 = vsel %vm653, %v1459, -inf
      %1483 = vmax.xlane.f32.xlu0 %v1482
      %v1484 = vpop.xlane.xlu0 %1483
      %v1485 = vsub.f32 %v1442, %v1463
      %v1486 = vsub.f32 %v1444, %v1466
      %v1487 = vsub.f32 %v1447, %v1469
      %v1488 = vsub.f32 %v1449, %v1472
      %v1489 = vsub.f32 %v1452, %v1475
      %v1490 = vsub.f32 %v1454, %v1478
      %v1491 = vsub.f32 %v1457, %v1481
      %v1492 = vsub.f32 %v1459, %v1484
      %v1493 = vmul.f32 %v1485, 1.442695
      %v1494 = vpow.pop %v1493
      %v1495 = vmul.f32 %v1486, 1.442695
      %v1496 = vpow.pop %v1495
      %v1497 = vmul.f32 %v1487, 1.442695
      %v1498 = vpow.pop %v1497
      %v1499 = vmul.f32 %v1488, 1.442695
      %v1500 = vpow.pop %v1499
      %v1501 = vmul.f32 %v1489, 1.442695
      %v1502 = vpow.pop %v1501
      %v1503 = vmul.f32 %v1490, 1.442695
      %v1504 = vpow.pop %v1503
      %v1505 = vmul.f32 %v1491, 1.442695
      %v1506 = vpow.pop %v1505
      %v1507 = vmul.f32 %v1492, 1.442695
      %v1508 = vpow.pop %v1507
      %v1509 = vsel %vm653, %v1494, 0.0
      %1510 = vadd.xlane.f32.xlu0 %v1509
      %v1511 = vpop.xlane.xlu0 %1510
      %v1512 = vsel %vm653, %v1496, 0.0
      %1513 = vadd.xlane.f32.xlu0 %v1512
      %v1514 = vpop.xlane.xlu0 %1513
      %v1515 = vsel %vm653, %v1498, 0.0
      %1516 = vadd.xlane.f32.xlu0 %v1515
      %v1517 = vpop.xlane.xlu0 %1516
      %v1518 = vsel %vm653, %v1500, 0.0
      %1519 = vadd.xlane.f32.xlu0 %v1518
      %v1520 = vpop.xlane.xlu0 %1519
      %v1521 = vsel %vm653, %v1502, 0.0
      %1522 = vadd.xlane.f32.xlu0 %v1521
      %v1523 = vpop.xlane.xlu0 %1522
      %v1524 = vsel %vm653, %v1504, 0.0
      %1525 = vadd.xlane.f32.xlu0 %v1524
      %v1526 = vpop.xlane.xlu0 %1525
      %v1527 = vsel %vm653, %v1506, 0.0
      %1528 = vadd.xlane.f32.xlu0 %v1527
      %v1529 = vpop.xlane.xlu0 %1528
      %v1530 = vsel %vm653, %v1508, 0.0
      %1531 = vadd.xlane.f32.xlu0 %v1530
      %v1532 = vpop.xlane.xlu0 %1531
      %v1533 = vrcp.pop %v1511
      %v1534 = vrcp.pop %v1514
      %v1535 = vrcp.pop %v1517
      %v1536 = vrcp.pop %v1520
      %v1537 = vrcp.pop %v1523
      %v1538 = vrcp.pop %v1526
      %v1539 = vrcp.pop %v1529
      %v1540 = vrcp.pop %v1532
      %v1541 = vmul.f32 %v1494, %v1533
      %v1542 = vmul.f32 %v1496, %v1534
      %v1543 = vmul.f32 %v1498, %v1535
      %v1544 = vmul.f32 %v1500, %v1536
      %v1545 = vmul.f32 %v1502, %v1537
      %v1546 = vmul.f32 %v1504, %v1538
      %v1547 = vmul.f32 %v1506, %v1539
      %v1548 = vmul.f32 %v1508, %v1540
      %v1549 = vpack.c.bf16 %v1542, %v1541
      %v1550 = vpack.c.bf16 %v1544, %v1543
      %v1551 = vpack.c.bf16 %v1546, %v1545
      %v1552 = vpack.c.bf16 %v1548, %v1547
      %1553 = vrot.lane.b32.xlu0 %v762, 104
      %v1554 = vpop.permute.xlu0 %1553
      %1555 = vrot.lane.b32.xlu0 %v763, 104
      %v1556 = vpop.permute.xlu0 %1555
      %1557 = vrot.lane.b32.xlu0 %v764, 104
      %v1558 = vpop.permute.xlu0 %1557
      %1559 = vrot.lane.b32.xlu0 %v765, 104
      %v1560 = vpop.permute.xlu0 %1559
      %v1566 = vsel %vm653, %v1549, 0
      %v1569 = vsel %vm653, %v1550, 0
      %v1572 = vsel %vm653, %v1551, 0
      %v1575 = vsel %vm653, %v1552, 0
      %1577 = vmatpush.bf16.msra.mxu0 0
      %1578 = vmatpush.bf16.msra.mxu0 0
      %1579 = vmatpush.bf16.msra.mxu0 0
      %1580 = vmatpush.bf16.msra.mxu0 0
      %1581 = vmatpush.bf16.msra.mxu0 %v1560
      %1582 = vmatpush.bf16.msra.mxu0 %v1558
      %1583 = vmatpush.bf16.msra.mxu0 %v1556
      %1584 = vmatpush.bf16.msra.mxu0 %v1554
      %1585 = vmatmul.bf16.gmra.mxu0 %v1566
      %v1586 = vpop.f32.mrf.mxu0
      %v1587 = vadd.f32 0.0, %v1586
      %v1588 = vpop.f32.mrf.mxu0
      %v1589 = vadd.f32 0.0, %v1588
      %1590 = vmatmul.bf16.gmra.mxu0 %v1569
      %v1591 = vpop.f32.mrf.mxu0
      %v1592 = vadd.f32 0.0, %v1591
      %v1593 = vpop.f32.mrf.mxu0
      %v1594 = vadd.f32 0.0, %v1593
      %1595 = vmatmul.bf16.gmra.mxu0 %v1572
      %v1596 = vpop.f32.mrf.mxu0
      %v1597 = vadd.f32 0.0, %v1596
      %v1598 = vpop.f32.mrf.mxu0
      %v1599 = vadd.f32 0.0, %v1598
      %1600 = vmatmul.bf16.gmra.mxu0 %v1575
      %v1601 = vpop.f32.mrf.mxu0
      %v1602 = vadd.f32 0.0, %v1601
      %v1603 = vpop.f32.mrf.mxu0
      %v1604 = vadd.f32 0.0, %v1603
      %1605 = vdwg.mxu0
      %v1606 = vpack.c.bf16 %v1589, %v1587
      %v1607 = vpack.c.bf16 %v1594, %v1592
      %v1608 = vpack.c.bf16 %v1599, %v1597
      %v1609 = vpack.c.bf16 %v1604, %v1602
      %v1611 = vsel %vm599, %v1606, 0
      %v1614 = vsel %vm599, %v1607, 0
      %v1617 = vsel %vm599, %v1608, 0
      %v1620 = vsel %vm599, %v1609, 0
      %v1623 = vsel %vm1045, %v357, 0
      %1625 = vmatpush.bf16.msra.mxu0 0
      %1626 = vmatpush.bf16.msra.mxu0 0
      %1627 = vmatpush.bf16.msra.mxu0 0
      %1628 = vmatpush.bf16.msra.mxu0 0
      %1629 = vmatpush.bf16.msra.mxu0 0
      %1630 = vmatpush.bf16.msra.mxu0 0
      %1631 = vmatpush.bf16.msra.mxu0 0
      %1632 = vmatpush.bf16.msra.mxu0 %v1623
      %1633 = vmatmul.bf16.gmra.mxu0 %v1611
      %v1634 = vpop.f32.mrf.mxu0
      %v1635 = vadd.f32 0.0, %v1634
      %v1636 = vpop.f32.mrf.mxu0
      %v1637 = vadd.f32 0.0, %v1636
      %1638 = vmatmul.bf16.gmra.mxu0 %v1614
      %v1639 = vpop.f32.mrf.mxu0
      %v1640 = vadd.f32 0.0, %v1639
      %v1641 = vpop.f32.mrf.mxu0
      %v1642 = vadd.f32 0.0, %v1641
      %1643 = vmatmul.bf16.gmra.mxu0 %v1617
      %v1644 = vpop.f32.mrf.mxu0
      %v1645 = vadd.f32 0.0, %v1644
      %v1646 = vpop.f32.mrf.mxu0
      %v1647 = vadd.f32 0.0, %v1646
      %1648 = vmatmul.bf16.gmra.mxu0 %v1620
      %v1649 = vpop.f32.mrf.mxu0
      %v1650 = vadd.f32 0.0, %v1649
      %v1651 = vpop.f32.mrf.mxu0
      %v1652 = vadd.f32 0.0, %v1651
      %1653 = vdwg.mxu0
      %v1654 = vadd.f32 %v1384, %v1635
      %v1655 = vadd.f32 %v1385, %v1637
      %v1656 = vadd.f32 %v1386, %v1640
      %v1657 = vadd.f32 %v1387, %v1642
      %v1658 = vadd.f32 %v1388, %v1645
      %v1659 = vadd.f32 %v1389, %v1647
      %v1660 = vadd.f32 %v1390, %v1650
      %v1661 = vadd.f32 %v1391, %v1652
      %v1663 = vperm.slane %v361, 0
      %v1665 = vadd.f32 %v1654, %v1663
      %v1666 = vadd.f32 %v1655, %v1663
      %v1667 = vadd.f32 %v1656, %v1663
      %v1668 = vadd.f32 %v1657, %v1663
      %v1669 = vadd.f32 %v1658, %v1663
      %v1670 = vadd.f32 %v1659, %v1663
      %v1671 = vadd.f32 %v1660, %v1663
      %v1672 = vadd.f32 %v1661, %v1663
      %1673 = vst.msk [vmem:[%s332] sm:$0xff] %vm397, %v1665
      %1674 = vst.msk [vmem:[%s332 + $0x8] sm:$0xff] %vm397, %v1666
      %1675 = vst.msk [vmem:[%s332 + $0x10] sm:$0xff] %vm397, %v1667
      %1676 = vst.msk [vmem:[%s332 + $0x18] sm:$0xff] %vm397, %v1668
      %1677 = vst.msk [vmem:[%s332 + $0x20] sm:$0xff] %vm397, %v1669
      %1678 = vst.msk [vmem:[%s332 + $0x28] sm:$0xff] %vm397, %v1670
      %1679 = vst.msk [vmem:[%s332 + $0x30] sm:$0xff] %vm397, %v1671
      %1680 = vst.msk [vmem:[%s332 + $0x38] sm:$0xff] %vm397, %v1672
      %p1681 = scmp.lt.s32.totalorder %s20, 1
      %s1682 = scalar_select %p1681, %s20, 1
      %s1683 = smul.addr %s1682, 8
      %s1684 = smul.addr %s1683, 8
      %s1685 = scalar_lea.vmem %s9, %s1684
      // Predicated region
      $region57: #{tpu_custom_call.1} parent=55 // pred_check
        %p1686 = pneg %p232
      $region58: #{tpu_custom_call.1} parent=55 // pred_check_branch
        %1688 = sbr.rel (%p1686) target = $region60
      $region59: #{tpu_custom_call.1} parent=55 // pred_region
        _
      $region60: #{tpu_custom_call.1} parent=55 // pred_fallthru
        _
    $region56: #{tpu_custom_call.1} parent=5 // pred_fallthru
      _
    %p1689 = scmp.le.s32.totalorder 2, %s15
    // Predicated region
    $region61: #{tpu_custom_call.1} parent=5 // pred_check
      %p1690 = pneg %p1689
    $region62: #{tpu_custom_call.1} parent=5 // pred_check_branch
      %1692 = sbr.rel (%p1690) target = $region64
    $region63: #{tpu_custom_call.1} parent=5 // pred_region
      %s1693 = ssub.s32 %s15, 2
      // Predicated region
      $region65: #{tpu_custom_call.1} parent=63 // pred_check
        %p1694 = pneg %p238
      $region66: #{tpu_custom_call.1} parent=63 // pred_check_branch
        %1696 = sbr.rel (%p1694) target = $region68
      $region67: #{tpu_custom_call.1} parent=63 // pred_region
        %p1697 = scmp.lt.s32.totalorder %s21, 1
        %s1698 = scalar_select %p1697, %s21, 1
        %s1699 = smul.addr %s1698, 8
        %s1700 = smul.addr %s1699, 8
        %s1701 = scalar_lea.vmem %s9, %s1700
      $region68: #{tpu_custom_call.1} parent=63 // pred_fallthru
        _
    $region64: #{tpu_custom_call.1} parent=5 // pred_fallthru
      _
  $region6: #{tpu_custom_call.1} parent=0 // loop_footer
    %s19 = sadd.s32 1, %s15
  $region7: #{tpu_custom_call.1} parent=0 // loop_footer_branch
    %14 = sbr.rel target = $region3
  $region8: #{tpu_custom_call.1} parent=0 // loop_exit
    _

</llo_original>
